<compile_context>
chip_gen: v5e
topology: v5e:2x2
jax: 0.10.0
libtpu: 0.0.40
codegen_flags: <defaults>
</compile_context>

<pallas_src>
import jax
import jax.numpy as jnp
import numpy as np
from jax.experimental import pallas as pl
from jax.experimental.pallas import tpu as pltpu

_INV_SQRT2 = 0.7071067811865476
_LN_EPS = 1e-5


# --------------------------------------------------------------------------
# Stage 1: LayerNorm + pos_emb + (x @ W1^T + b1) + GELU  ->  h (bf16)
# --------------------------------------------------------------------------
def _make_stage1_kernel(n_layers, f_per_layer, use_ln, use_pos):
    """Kernel closure over static config (layer count, LN / pos flags)."""
    inv_din = 1.0 / float(n_layers * f_per_layer)

    def kernel(*refs):
        hs = refs[:n_layers]                       # n_layers x (tm, F) inputs
        (lnw_ref, lnb_ref, pos_ref, w1_ref, b1_ref,
         h_ref, mean_scr, rstd_scr, acc_scr) = refs[n_layers:]

        k = pl.program_id(2)                       # layer / reduction axis

        # Unrolled per-layer branches: layer j's normalize + matmul runs on
        # grid step k == j, so the VPU work overlaps the MXU across steps and
        # no normalized-activation cache scratch is needed.  ln_w / ln_b /
        # pos / W1^T are already the layer-k slices via their BlockSpecs.
        for j, x_ref in enumerate(hs):

            @pl.when(k == j)
            def _step(x_ref=x_ref, j=j):
                xf = x_ref[...].astype(jnp.float32)

                if use_ln:
                    if j == 0:
                        # Two-pass LayerNorm statistics over the full
                        # concatenated feature dim (all layer tiles are
                        # resident in VMEM for this (b, t) tile): mean first,
                        # then centered sum of squares (avoids E[x^2]-mean^2
                        # cancellation on outlier-heavy vision activations).
                        s = jnp.sum(xf, axis=-1, keepdims=True)
                        for r in hs[1:]:
                            s = s + jnp.sum(r[...].astype(jnp.float32),
                                            axis=-1, keepdims=True)
                        mean = s * inv_din
                        d0 = xf - mean
                        ss = jnp.sum(d0 * d0, axis=-1, keepdims=True)
                        for r in hs[1:]:
                            d = r[...].astype(jnp.float32) - mean
                            ss = ss + jnp.sum(d * d, axis=-1, keepdims=True)
                        rstd = jax.lax.rsqrt(ss * inv_din + _LN_EPS)
                        mean_scr[...] = mean
                        rstd_scr[...] = rstd
                    else:
                        mean = mean_scr[...]
                        rstd = rstd_scr[...]
                    xn = (xf - mean) * rstd * lnw_ref[...] + lnb_ref[...]
                else:
                    xn = xf

                if use_pos:
                    xn = xn + pos_ref[...].astype(jnp.float32)

                # Streamed first matmul: layer-k activations x layer-k slice
                # of W1^T.  bf16 operands, f32 accumulation.
                contrib = jnp.dot(xn.astype(jnp.bfloat16), w1_ref[...],
                                  preferred_element_type=jnp.float32)
                if j == 0:
                    acc_scr[...] = contrib          # init by assignment
                else:
                    acc_scr[...] += contrib

                if j == n_layers - 1:
                    h = acc_scr[...] + b1_ref[...]
                    # Exact erf GELU (matches nn.GELU() default), kept in f32.
                    h = 0.5 * h * (1.0 + jax.lax.erf(h * jnp.float32(_INV_SQRT2)))
                    h_ref[...] = h.astype(h_ref.dtype)   # aligned bf16 store

    return kernel


# --------------------------------------------------------------------------
# Stage 2: y = h @ W2^T + b2 with W2 tiled over output columns.
# --------------------------------------------------------------------------
def _stage2_kernel(h_ref, w2_ref, b2_ref, o_ref):
    o_ref[...] = (jnp.dot(h_ref[...], w2_ref[...],
                          preferred_element_type=jnp.float32)
                  + b2_ref[...]).astype(o_ref.dtype)


# --------------------------------------------------------------------------
# Tiling helpers
# --------------------------------------------------------------------------
def _pick_token_tile(T, tm=None):
    """Pick token tile and padded token count.

    Defaults to the largest of {256,...,8} <= T (reviewer: tm=256 on v6e/v7x).
    Pass tm=128 on v5e, or a value making T_pad/tm even on v7x (2 TCs)."""
    if tm is None:
        for cand in (256, 128, 64, 32, 16, 8):
            if cand <= T:
                tm = cand
                break
        else:
            tm = T
    if tm >= T:
        tm = T
        t_pad = T
    else:
        t_pad = ((T + tm - 1) // tm) * tm
    assert tm == t_pad or tm % 8 == 0, "token tile must be sublane-aligned"
    return tm, t_pad


def _pick_col_tile(O, tn=None):
    """W2 output-column tile for stage 2 (keeps W2 block << full (O, O))."""
    if tn is None:
        if O <= 1024:
            tn = O
        else:
            for cand in (1024, 512, 256, 128):
                if O % cand == 0:
                    tn = cand
                    break
            else:
                tn = O
    assert O % tn == 0, f"O={O} must be divisible by tn={tn}"
    return tn


def _vmem_limit_bytes(request=100 * 1024 * 1024):
    """~100 MiB on 128-MiB chips (v5e/v6e), ~90% of physical on v7x."""
    try:
        cap = int(getattr(pltpu.get_tpu_info(), "vmem_capacity_bytes",
                          128 * 1024 * 1024))
    except Exception:
        cap = 128 * 1024 * 1024
    return int(min(request, int(cap * 0.9)))


# --------------------------------------------------------------------------
# Wrapper
# --------------------------------------------------------------------------
def image_adapter_forward(hidden_states, params, *, deep_extract=True,
                          ln1=True, pos_emb=True, tm=None, tn=None,
                          out_dtype=jnp.float32):
    """hidden_states: indexable stack of vision hidden states, each (B, T, F).

    Passing the deep-extract layers individually avoids ever materializing the
    (B, T, 5F) concatenation in HBM."""
    if deep_extract:
        layers = [hidden_states[-2], hidden_states[3], hidden_states[7],
                  hidden_states[13], hidden_states[20]]
    else:
        layers = [hidden_states[-2]]
    n_layers = len(layers)
    B, T, F = layers[0].shape
    din = n_layers * F
    O = params["w1"].shape[0]

    tm, T_pad = _pick_token_tile(T, tm)
    tn = _pick_col_tile(O, tn)
    n_t = T_pad // tm
    n_n = O // tn
    pad = T_pad - T
    if pad:
        # Pad the token axis (e.g. 729 -> 768 at production sizes); padded
        # rows are sliced away from y below.
        layers = [jnp.pad(x, ((0, 0), (0, pad), (0, 0))) for x in layers]

    # One-time parameter plumbing (outside the kernels): per-layer views,
    # bf16 MXU weights, bf16 pos_emb.
    if ln1:
        ln_w = params["ln_w"].reshape(n_layers, 1, F).astype(jnp.float32)
        ln_b = params["ln_b"].reshape(n_layers, 1, F).astype(jnp.float32)
    else:
        ln_w = jnp.ones((n_layers, 1, F), jnp.float32)
        ln_b = jnp.zeros((n_layers, 1, F), jnp.float32)
    if pos_emb:
        pos = jnp.transpose(params["pos_emb"].reshape(T, n_layers, F),
                            (1, 0, 2))                         # (n, T, F)
        if pad:
            pos = jnp.pad(pos, ((0, 0), (0, pad), (0, 0)))
        pos = pos.astype(jnp.bfloat16)
    else:
        pos = jnp.zeros((n_layers, T_pad, F), jnp.bfloat16)
    w1t = params["w1"].T.reshape(n_layers, F, O).astype(jnp.bfloat16)
    b1 = params["b1"].reshape(1, O).astype(jnp.float32)
    w2t = params["w2"].T.astype(jnp.bfloat16)
    b2 = params["b2"].reshape(1, O).astype(jnp.float32)

    vmem_limit = _vmem_limit_bytes()
    in_itemsize = layers[0].dtype.itemsize
    out_itemsize = jnp.dtype(out_dtype).itemsize

    # ---------------- Stage 1 ----------------
    flops1 = 2 * B * T_pad * din * O
    bytes1 = (B * T_pad * din * in_itemsize          # activations (per (b,t))
              + B * n_t * din * O * 2                # W1 streamed per (b,t)
              + B * T_pad * din * 2                  # pos per (b,t,k)
              + 2 * n_layers * F * 4 + O * 4         # ln params, b1
              + B * T_pad * O * 2)                   # h (bf16) out

    layer_spec = pl.BlockSpec((pl.Squeezed(), tm, F), lambda b, t, k: (b, t, 0))

    h = pl.pallas_call(
        _make_stage1_kernel(n_layers, F, ln1, pos_emb),
        out_shape=jax.ShapeDtypeStruct((B, T_pad, O), jnp.bfloat16),
        grid=(B, n_t, n_layers),
        in_specs=(
            [layer_spec] * n_layers + [
                pl.BlockSpec((pl.Squeezed(), 1, F),
                             lambda b, t, k: (k, 0, 0)),               # ln_w[k]
                pl.BlockSpec((pl.Squeezed(), 1, F),
                             lambda b, t, k: (k, 0, 0)),               # ln_b[k]
                pl.BlockSpec((pl.Squeezed(), tm, F),
                             lambda b, t, k: (k, t, 0)),               # pos[k]
                pl.BlockSpec((pl.Squeezed(), F, O),
                             lambda b, t, k: (k, 0, 0)),               # W1^T[k]
                pl.BlockSpec((1, O), lambda b, t, k: (0, 0)),          # b1
            ]),
        out_specs=pl.BlockSpec((pl.Squeezed(), tm, O), lambda b, t, k: (b, t, 0)),
        scratch_shapes=[
            pltpu.VMEM((tm, 1), jnp.float32),        # mean
            pltpu.VMEM((tm, 1), jnp.float32),        # rstd
            pltpu.VMEM((tm, O), jnp.float32),        # matmul-1 accumulator
        ],
        compiler_params=pltpu.CompilerParams(
            dimension_semantics=("parallel", "parallel", "arbitrary"),
            vmem_limit_bytes=vmem_limit),
        cost_estimate=pl.CostEstimate(
            flops=int(flops1), transcendentals=int(B * T_pad * O),
            bytes_accessed=int(bytes1)),
    )(*layers, ln_w, ln_b, pos, w1t, b1)

    # ---------------- Stage 2 ----------------
    flops2 = 2 * B * T_pad * O * O
    bytes2 = (B * n_n * T_pad * O * 2                # h re-read per col tile
              + B * O * O * 2                        # W2 (bf16)
              + O * 4                                # b2
              + B * T_pad * O * out_itemsize)        # y out

    y = pl.pallas_call(
        _stage2_kernel,
        out_shape=jax.ShapeDtypeStruct((B, T_pad, O), out_dtype),
        grid=(B, n_n, n_t),                          # t innermost: W2 fetched once per col tile
        in_specs=[
            pl.BlockSpec((pl.Squeezed(), tm, O), lambda b, n, t: (b, t, 0)),  # h
            pl.BlockSpec((O, tn), lambda b, n, t: (0, n)),                    # W2^T cols
            pl.BlockSpec((1, tn), lambda b, n, t: (0, n)),                    # b2
        ],
        out_specs=pl.BlockSpec((pl.Squeezed(), tm, tn), lambda b, n, t: (b, t, n)),
        compiler_params=pltpu.CompilerParams(
            dimension_semantics=("parallel", "parallel", "parallel"),
            vmem_limit_bytes=vmem_limit),
        cost_estimate=pl.CostEstimate(
            flops=int(flops2), transcendentals=0, bytes_accessed=int(bytes2)),
    )(h, w2t, b2)

    if pad:
        y = y[:, :T, :]

    # Assemble [tok0, y, tok1] in the wrapper so every kernel store is a plain
    # sublane-aligned vst (no offset-1 masked stores on the big y slab).
    tok = params["other_tokens"].astype(out_dtype)
    tok0 = jnp.broadcast_to(tok[0][None, None, :], (B, 1, O))
    tok1 = jnp.broadcast_to(tok[1][None, None, :], (B, 1, O))
    return jnp.concatenate([tok0, y.astype(out_dtype), tok1], axis=1)


# --------------------------------------------------------------------------
# Synthetic params + pure-JAX reference
# --------------------------------------------------------------------------
def make_params(key, input_features, output_features, num_image_tokens,
                deep_extract):
    """Deterministic synthetic parameter init (shapes match the nn.Module)."""
    din = input_features * 5 if deep_extract else input_features
    ks = jax.random.split(key, 8)
    return {
        "ln_w": 1.0 + 0.1 * jax.random.normal(ks[0], (din,), jnp.float32),
        "ln_b": 0.1 * jax.random.normal(ks[1], (din,), jnp.float32),
        # pos_emb is zero-init in torch; randomize so the add is tested.
        "pos_emb": 0.02 * jax.random.normal(
            ks[2], (num_image_tokens, din), jnp.float32),
        "w1": jax.random.normal(ks[3], (output_features, din), jnp.float32)
              * (1.0 / np.sqrt(din)),
        "b1": 0.05 * jax.random.normal(ks[4], (output_features,), jnp.float32),
        "w2": jax.random.normal(ks[5], (output_features, output_features),
                                jnp.float32) * (1.0 / np.sqrt(output_features)),
        "b2": 0.05 * jax.random.normal(ks[6], (output_features,), jnp.float32),
        "other_tokens": 0.02 * jax.random.normal(
            ks[7], (3, output_features), jnp.float32),
    }


def reference_forward(hidden_states, params, *, deep_extract=True,
                      mxu_bf16=False):
    """Pure-JAX reference mirroring the PyTorch forward.

    mxu_bf16=True applies the same bf16-operand / f32-accumulate matmul (and
    bf16 pos_emb) precision as the kernels, for a tight comparison."""
    if deep_extract:
        x = jnp.concatenate(
            (hidden_states[-2], hidden_states[3], hidden_states[7],
             hidden_states[13], hidden_states[20]), axis=-1)
    else:
        x = hidden_states[-2]
    mean = x.mean(-1, keepdims=True)
    var = jnp.square(x - mean).mean(-1, keepdims=True)
    xn = (x - mean) * jax.lax.rsqrt(var + _LN_EPS) * params["ln_w"] + params["ln_b"]
    pos = params["pos_emb"]
    if mxu_bf16:
        pos = pos.astype(jnp.bfloat16).astype(jnp.float32)
    xn = xn + pos
    w1t = params["w1"].T
    w2t = params["w2"].T
    if mxu_bf16:
        xn_in, w1t = xn.astype(jnp.bfloat16), w1t.astype(jnp.bfloat16)
    else:
        xn_in = xn
    h = jnp.dot(xn_in, w1t, preferred_element_type=jnp.float32) + params["b1"]
    h = 0.5 * h * (1.0 + jax.lax.erf(h * _INV_SQRT2))      # exact GELU
    if mxu_bf16:
        h_in, w2t = h.astype(jnp.bfloat16), w2t.astype(jnp.bfloat16)
    else:
        h_in = h
    y = jnp.dot(h_in, w2t, preferred_element_type=jnp.float32) + params["b2"]
    B = x.shape[0]
    tok = jnp.broadcast_to(params["other_tokens"][:2][None], (B, 2, y.shape[-1]))
    return jnp.concatenate([tok[:, 0:1], y, tok[:, 1:2]], axis=1)


if __name__ == "__main__":
    # Small shapes: 24 hidden states (indices 3,7,13,20,-2 used), batch=2,
    # num_image_tokens=12 (not a multiple of 8 -> exercises wrapper-side token
    # padding to 16 and tm=8 tiling), per-layer features=16, out features=32.
    L, B, T, F, O = 24, 2, 12, 16, 32
    key = jax.random.PRNGKey(0)
    k_vis, k_par = jax.random.split(key)

    vision_outputs = jax.random.normal(k_vis, (L, B, T, F), jnp.float32)

    # ---- deep_extract=True (Joy-caption config: ln1 + pos_emb) ----
    params = make_params(k_par, F, O, num_image_tokens=T, deep_extract=True)
    out = image_adapter_forward(vision_outputs, params, deep_extract=True, tm=8)
    out = jax.block_until_ready(out)
    assert out.shape == (B, T + 2, O), out.shape

    # Tight check against a reference with matching bf16-MXU precision.
    ref_bf16 = reference_forward(vision_outputs, params, deep_extract=True,
                                 mxu_bf16=True)
    np.testing.assert_allclose(np.asarray(out), np.asarray(ref_bf16),
                               rtol=1e-2, atol=1e-2)

    # Sanity check against the exact f32 PyTorch-equivalent forward
    # (difference is only bf16 operand rounding in the two matmuls / pos).
    ref_f32 = reference_forward(vision_outputs, params, deep_extract=True,
                                mxu_bf16=False)
    np.testing.assert_allclose(np.asarray(out), np.asarray(ref_f32),
                               rtol=5e-2, atol=5e-2)

    # ---- deep_extract=False (single hidden state; layer grid axis of 1) ----
    params1 = make_params(jax.random.PRNGKey(1), F, O, num_image_tokens=T,
                          deep_extract=False)
    out1 = image_adapter_forward(vision_outputs, params1, deep_extract=False,
                                 tm=8)
    out1 = jax.block_until_ready(out1)
    ref1 = reference_forward(vision_outputs, params1, deep_extract=False,
                             mxu_bf16=True)
    np.testing.assert_allclose(np.asarray(out1), np.asarray(ref1),
                               rtol=1e-2, atol=1e-2)

    print("KERNEL_OK")
</pallas_src>

<mosaic_0001>
module attributes {stable_mosaic.version = 11 : i64} {
  func.func @kernel(%arg0: i32, %arg1: i32, %arg2: i32, %arg3: memref<1x8x16xf32, #tpu.memory_space<vmem>>, %arg4: memref<1x8x16xf32, #tpu.memory_space<vmem>>, %arg5: memref<1x8x16xf32, #tpu.memory_space<vmem>>, %arg6: memref<1x8x16xf32, #tpu.memory_space<vmem>>, %arg7: memref<1x8x16xf32, #tpu.memory_space<vmem>>, %arg8: memref<1x1x16xf32, #tpu.memory_space<vmem>>, %arg9: memref<1x1x16xf32, #tpu.memory_space<vmem>>, %arg10: memref<1x8x16xbf16, #tpu.memory_space<vmem>>, %arg11: memref<1x16x32xbf16, #tpu.memory_space<vmem>>, %arg12: memref<1x32xf32, #tpu.memory_space<vmem>>, %arg13: memref<1x8x32xbf16, #tpu.memory_space<vmem>>, %arg14: memref<8x1xf32, #tpu.memory_space<vmem>>, %arg15: memref<8x1xf32, #tpu.memory_space<vmem>>, %arg16: memref<8x32xf32, #tpu.memory_space<vmem>>) attributes {dimension_semantics = [#tpu.dimension_semantics<parallel>, #tpu.dimension_semantics<parallel>, #tpu.dimension_semantics<arbitrary>], iteration_bounds = array<i64: 2, 2, 5>, scalar_prefetch = 0 : i64, scratch_operands = 3 : i64, tpu.core_type = #tpu.core_type<tc>, window_params = [{transform_indices = @transform_0, window_bounds = array<i64: 1, 8, 16>}, {transform_indices = @transform_1, window_bounds = array<i64: 1, 8, 16>}, {transform_indices = @transform_2, window_bounds = array<i64: 1, 8, 16>}, {transform_indices = @transform_3, window_bounds = array<i64: 1, 8, 16>}, {transform_indices = @transform_4, window_bounds = array<i64: 1, 8, 16>}, {transform_indices = @transform_5, window_bounds = array<i64: 1, 1, 16>}, {transform_indices = @transform_6, window_bounds = array<i64: 1, 1, 16>}, {transform_indices = @transform_7, window_bounds = array<i64: 1, 8, 16>}, {transform_indices = @transform_8, window_bounds = array<i64: 1, 16, 32>}, {pipeline_mode = #tpu.pipeline_mode<synchronous>, transform_indices = @transform_9, window_bounds = array<i64: 1, 32>}, {transform_indices = @transform_10, window_bounds = array<i64: 1, 8, 32>}]} {
    %c0_i32 = arith.constant 0 : i32
    %0 = arith.cmpi eq, %arg2, %c0_i32 : i32
    %1 = arith.extui %0 : i1 to i32
    %c0_i32_0 = arith.constant 0 : i32
    %2 = arith.cmpi ne, %1, %c0_i32_0 : i32
    scf.if %2 {
      %c0 = arith.constant 0 : index
      %c0_5 = arith.constant 0 : index
      %c0_6 = arith.constant 0 : index
      %15 = vector.load %arg3[%c0, %c0_5, %c0_6] : memref<1x8x16xf32, #tpu.memory_space<vmem>>, vector<1x8x16xf32>
      %16 = vector.shape_cast %15 : vector<1x8x16xf32> to vector<8x16xf32>
      %cst = arith.constant dense<0.000000e+00> : vector<8xf32>
      %17 = vector.multi_reduction <add>, %16, %cst [1] : vector<8x16xf32> to vector<8xf32>
      %18 = vector.shape_cast %17 : vector<8xf32> to vector<8x1xf32>
      %c0_7 = arith.constant 0 : index
      %c0_8 = arith.constant 0 : index
      %c0_9 = arith.constant 0 : index
      %19 = vector.load %arg4[%c0_7, %c0_8, %c0_9] : memref<1x8x16xf32, #tpu.memory_space<vmem>>, vector<1x8x16xf32>
      %20 = vector.shape_cast %19 : vector<1x8x16xf32> to vector<8x16xf32>
      %cst_10 = arith.constant dense<0.000000e+00> : vector<8xf32>
      %21 = vector.multi_reduction <add>, %20, %cst_10 [1] : vector<8x16xf32> to vector<8xf32>
      %22 = vector.shape_cast %21 : vector<8xf32> to vector<8x1xf32>
      %23 = arith.addf %18, %22 : vector<8x1xf32>
      %c0_11 = arith.constant 0 : index
      %c0_12 = arith.constant 0 : index
      %c0_13 = arith.constant 0 : index
      %24 = vector.load %arg5[%c0_11, %c0_12, %c0_13] : memref<1x8x16xf32, #tpu.memory_space<vmem>>, vector<1x8x16xf32>
      %25 = vector.shape_cast %24 : vector<1x8x16xf32> to vector<8x16xf32>
      %cst_14 = arith.constant dense<0.000000e+00> : vector<8xf32>
      %26 = vector.multi_reduction <add>, %25, %cst_14 [1] : vector<8x16xf32> to vector<8xf32>
      %27 = vector.shape_cast %26 : vector<8xf32> to vector<8x1xf32>
      %28 = arith.addf %23, %27 : vector<8x1xf32>
      %c0_15 = arith.constant 0 : index
      %c0_16 = arith.constant 0 : index
      %c0_17 = arith.constant 0 : index
      %29 = vector.load %arg6[%c0_15, %c0_16, %c0_17] : memref<1x8x16xf32, #tpu.memory_space<vmem>>, vector<1x8x16xf32>
      %30 = vector.shape_cast %29 : vector<1x8x16xf32> to vector<8x16xf32>
      %cst_18 = arith.constant dense<0.000000e+00> : vector<8xf32>
      %31 = vector.multi_reduction <add>, %30, %cst_18 [1] : vector<8x16xf32> to vector<8xf32>
      %32 = vector.shape_cast %31 : vector<8xf32> to vector<8x1xf32>
      %33 = arith.addf %28, %32 : vector<8x1xf32>
      %c0_19 = arith.constant 0 : index
      %c0_20 = arith.constant 0 : index
      %c0_21 = arith.constant 0 : index
      %34 = vector.load %arg7[%c0_19, %c0_20, %c0_21] : memref<1x8x16xf32, #tpu.memory_space<vmem>>, vector<1x8x16xf32>
      %35 = vector.shape_cast %34 : vector<1x8x16xf32> to vector<8x16xf32>
      %cst_22 = arith.constant dense<0.000000e+00> : vector<8xf32>
      %36 = vector.multi_reduction <add>, %35, %cst_22 [1] : vector<8x16xf32> to vector<8xf32>
      %37 = vector.shape_cast %36 : vector<8xf32> to vector<8x1xf32>
      %38 = arith.addf %33, %37 : vector<8x1xf32>
      %cst_23 = arith.constant 1.250000e-02 : f32
      %39 = vector.broadcast %cst_23 : f32 to vector<8x1xf32>
      %40 = arith.mulf %38, %39 : vector<8x1xf32>
      %41 = vector.broadcast %40 : vector<8x1xf32> to vector<8x16xf32>
      %42 = arith.subf %16, %41 : vector<8x16xf32>
      %43 = arith.mulf %42, %42 : vector<8x16xf32>
      %cst_24 = arith.constant dense<0.000000e+00> : vector<8xf32>
      %44 = vector.multi_reduction <add>, %43, %cst_24 [1] : vector<8x16xf32> to vector<8xf32>
      %45 = vector.shape_cast %44 : vector<8xf32> to vector<8x1xf32>
      %c0_25 = arith.constant 0 : index
      %c0_26 = arith.constant 0 : index
      %c0_27 = arith.constant 0 : index
      %46 = vector.load %arg4[%c0_25, %c0_26, %c0_27] : memref<1x8x16xf32, #tpu.memory_space<vmem>>, vector<1x8x16xf32>
      %47 = vector.shape_cast %46 : vector<1x8x16xf32> to vector<8x16xf32>
      %48 = vector.broadcast %40 : vector<8x1xf32> to vector<8x16xf32>
      %49 = arith.subf %47, %48 : vector<8x16xf32>
      %50 = arith.mulf %49, %49 : vector<8x16xf32>
      %cst_28 = arith.constant dense<0.000000e+00> : vector<8xf32>
      %51 = vector.multi_reduction <add>, %50, %cst_28 [1] : vector<8x16xf32> to vector<8xf32>
      %52 = vector.shape_cast %51 : vector<8xf32> to vector<8x1xf32>
      %53 = arith.addf %45, %52 : vector<8x1xf32>
      %c0_29 = arith.constant 0 : index
      %c0_30 = arith.constant 0 : index
      %c0_31 = arith.constant 0 : index
      %54 = vector.load %arg5[%c0_29, %c0_30, %c0_31] : memref<1x8x16xf32, #tpu.memory_space<vmem>>, vector<1x8x16xf32>
      %55 = vector.shape_cast %54 : vector<1x8x16xf32> to vector<8x16xf32>
      %56 = vector.broadcast %40 : vector<8x1xf32> to vector<8x16xf32>
      %57 = arith.subf %55, %56 : vector<8x16xf32>
      %58 = arith.mulf %57, %57 : vector<8x16xf32>
      %cst_32 = arith.constant dense<0.000000e+00> : vector<8xf32>
      %59 = vector.multi_reduction <add>, %58, %cst_32 [1] : vector<8x16xf32> to vector<8xf32>
      %60 = vector.shape_cast %59 : vector<8xf32> to vector<8x1xf32>
      %61 = arith.addf %53, %60 : vector<8x1xf32>
      %c0_33 = arith.constant 0 : index
      %c0_34 = arith.constant 0 : index
      %c0_35 = arith.constant 0 : index
      %62 = vector.load %arg6[%c0_33, %c0_34, %c0_35] : memref<1x8x16xf32, #tpu.memory_space<vmem>>, vector<1x8x16xf32>
      %63 = vector.shape_cast %62 : vector<1x8x16xf32> to vector<8x16xf32>
      %64 = vector.broadcast %40 : vector<8x1xf32> to vector<8x16xf32>
      %65 = arith.subf %63, %64 : vector<8x16xf32>
      %66 = arith.mulf %65, %65 : vector<8x16xf32>
      %cst_36 = arith.constant dense<0.000000e+00> : vector<8xf32>
      %67 = vector.multi_reduction <add>, %66, %cst_36 [1] : vector<8x16xf32> to vector<8xf32>
      %68 = vector.shape_cast %67 : vector<8xf32> to vector<8x1xf32>
      %69 = arith.addf %61, %68 : vector<8x1xf32>
      %c0_37 = arith.constant 0 : index
      %c0_38 = arith.constant 0 : index
      %c0_39 = arith.constant 0 : index
      %70 = vector.load %arg7[%c0_37, %c0_38, %c0_39] : memref<1x8x16xf32, #tpu.memory_space<vmem>>, vector<1x8x16xf32>
      %71 = vector.shape_cast %70 : vector<1x8x16xf32> to vector<8x16xf32>
      %72 = vector.broadcast %40 : vector<8x1xf32> to vector<8x16xf32>
      %73 = arith.subf %71, %72 : vector<8x16xf32>
      %74 = arith.mulf %73, %73 : vector<8x16xf32>
      %cst_40 = arith.constant dense<0.000000e+00> : vector<8xf32>
      %75 = vector.multi_reduction <add>, %74, %cst_40 [1] : vector<8x16xf32> to vector<8xf32>
      %76 = vector.shape_cast %75 : vector<8xf32> to vector<8x1xf32>
      %77 = arith.addf %69, %76 : vector<8x1xf32>
      %cst_41 = arith.constant 1.250000e-02 : f32
      %78 = vector.broadcast %cst_41 : f32 to vector<8x1xf32>
      %79 = arith.mulf %77, %78 : vector<8x1xf32>
      %cst_42 = arith.constant 9.99999974E-6 : f32
      %80 = vector.broadcast %cst_42 : f32 to vector<8x1xf32>
      %81 = arith.addf %79, %80 : vector<8x1xf32>
      %82 = math.rsqrt %81 : vector<8x1xf32>
      %c0_43 = arith.constant 0 : index
      %c0_44 = arith.constant 0 : index
      %83 = vector.load %arg14[%c0_43, %c0_44] : memref<8x1xf32, #tpu.memory_space<vmem>>, vector<8x1xf32>
      tpu.vector_store %arg14[%c0_43, %c0_44], %40 {strides = array<i32>} : memref<8x1xf32, #tpu.memory_space<vmem>>, vector<8x1xf32>,
      %c0_45 = arith.constant 0 : index
      %c0_46 = arith.constant 0 : index
      %84 = vector.load %arg15[%c0_45, %c0_46] : memref<8x1xf32, #tpu.memory_space<vmem>>, vector<8x1xf32>
      tpu.vector_store %arg15[%c0_45, %c0_46], %82 {strides = array<i32>} : memref<8x1xf32, #tpu.memory_space<vmem>>, vector<8x1xf32>,
      %85 = vector.broadcast %40 : vector<8x1xf32> to vector<8x16xf32>
      %86 = arith.subf %16, %85 : vector<8x16xf32>
      %87 = vector.broadcast %82 : vector<8x1xf32> to vector<8x16xf32>
      %88 = arith.mulf %86, %87 : vector<8x16xf32>
      %c0_47 = arith.constant 0 : index
      %c0_48 = arith.constant 0 : index
      %c0_49 = arith.constant 0 : index
      %89 = vector.load %arg8[%c0_47, %c0_48, %c0_49] : memref<1x1x16xf32, #tpu.memory_space<vmem>>, vector<1x1x16xf32>
      %90 = vector.shape_cast %89 : vector<1x1x16xf32> to vector<1x16xf32>
      %91 = vector.broadcast %90 : vector<1x16xf32> to vector<8x16xf32>
      %92 = arith.mulf %88, %91 : vector<8x16xf32>
      %c0_50 = arith.constant 0 : index
      %c0_51 = arith.constant 0 : index
      %c0_52 = arith.constant 0 : index
      %93 = vector.load %arg9[%c0_50, %c0_51, %c0_52] : memref<1x1x16xf32, #tpu.memory_space<vmem>>, vector<1x1x16xf32>
      %94 = vector.shape_cast %93 : vector<1x1x16xf32> to vector<1x16xf32>
      %95 = vector.broadcast %94 : vector<1x16xf32> to vector<8x16xf32>
      %96 = arith.addf %92, %95 : vector<8x16xf32>
      %c0_53 = arith.constant 0 : index
      %c0_54 = arith.constant 0 : index
      %c0_55 = arith.constant 0 : index
      %97 = vector.load %arg10[%c0_53, %c0_54, %c0_55] : memref<1x8x16xbf16, #tpu.memory_space<vmem>>, vector<1x8x16xbf16>
      %98 = vector.shape_cast %97 : vector<1x8x16xbf16> to vector<8x16xbf16>
      %99 = arith.extf %98 : vector<8x16xbf16> to vector<8x16xf32>
      %100 = arith.addf %96, %99 : vector<8x16xf32>
      %101 = arith.truncf %100 : vector<8x16xf32> to vector<8x16xbf16>
      %c0_56 = arith.constant 0 : index
      %c0_57 = arith.constant 0 : index
      %c0_58 = arith.constant 0 : index
      %102 = vector.load %arg11[%c0_56, %c0_57, %c0_58] : memref<1x16x32xbf16, #tpu.memory_space<vmem>>, vector<1x16x32xbf16>
      %103 = vector.shape_cast %102 : vector<1x16x32xbf16> to vector<16x32xbf16>
      %cst_59 = arith.constant dense<0.000000e+00> : vector<8x32xf32>
      %104 = tpu.matmul %101, %103, %cst_59 {dimension_numbers = #tpu.dot_dimension_numbers<[1], [0], [0], [1], [0, 0, 1, 1], [], []>} : vector<8x16xbf16>, vector<16x32xbf16>, vector<8x32xf32> -> vector<8x32xf32>
      %c0_60 = arith.constant 0 : index
      %c0_61 = arith.constant 0 : index
      %105 = vector.load %arg16[%c0_60, %c0_61] : memref<8x32xf32, #tpu.memory_space<vmem>>, vector<8x32xf32>
      tpu.vector_store %arg16[%c0_60, %c0_61], %104 {strides = array<i32>} : memref<8x32xf32, #tpu.memory_space<vmem>>, vector<8x32xf32>,
    } else {
    }
    %c1_i32 = arith.constant 1 : i32
    %3 = arith.cmpi eq, %arg2, %c1_i32 : i32
    %4 = arith.extui %3 : i1 to i32
    %c0_i32_1 = arith.constant 0 : i32
    %5 = arith.cmpi ne, %4, %c0_i32_1 : i32
    scf.if %5 {
      %c0 = arith.constant 0 : index
      %c0_5 = arith.constant 0 : index
      %c0_6 = arith.constant 0 : index
      %15 = vector.load %arg4[%c0, %c0_5, %c0_6] : memref<1x8x16xf32, #tpu.memory_space<vmem>>, vector<1x8x16xf32>
      %16 = vector.shape_cast %15 : vector<1x8x16xf32> to vector<8x16xf32>
      %c0_7 = arith.constant 0 : index
      %c0_8 = arith.constant 0 : index
      %17 = vector.load %arg14[%c0_7, %c0_8] : memref<8x1xf32, #tpu.memory_space<vmem>>, vector<8x1xf32>
      %c0_9 = arith.constant 0 : index
      %c0_10 = arith.constant 0 : index
      %18 = vector.load %arg15[%c0_9, %c0_10] : memref<8x1xf32, #tpu.memory_space<vmem>>, vector<8x1xf32>
      %19 = vector.broadcast %17 : vector<8x1xf32> to vector<8x16xf32>
      %20 = arith.subf %16, %19 : vector<8x16xf32>
      %21 = vector.broadcast %18 : vector<8x1xf32> to vector<8x16xf32>
      %22 = arith.mulf %20, %21 : vector<8x16xf32>
      %c0_11 = arith.constant 0 : index
      %c0_12 = arith.constant 0 : index
      %c0_13 = arith.constant 0 : index
      %23 = vector.load %arg8[%c0_11, %c0_12, %c0_13] : memref<1x1x16xf32, #tpu.memory_space<vmem>>, vector<1x1x16xf32>
      %24 = vector.shape_cast %23 : vector<1x1x16xf32> to vector<1x16xf32>
      %25 = vector.broadcast %24 : vector<1x16xf32> to vector<8x16xf32>
      %26 = arith.mulf %22, %25 : vector<8x16xf32>
      %c0_14 = arith.constant 0 : index
      %c0_15 = arith.constant 0 : index
      %c0_16 = arith.constant 0 : index
      %27 = vector.load %arg9[%c0_14, %c0_15, %c0_16] : memref<1x1x16xf32, #tpu.memory_space<vmem>>, vector<1x1x16xf32>
      %28 = vector.shape_cast %27 : vector<1x1x16xf32> to vector<1x16xf32>
      %29 = vector.broadcast %28 : vector<1x16xf32> to vector<8x16xf32>
      %30 = arith.addf %26, %29 : vector<8x16xf32>
      %c0_17 = arith.constant 0 : index
      %c0_18 = arith.constant 0 : index
      %c0_19 = arith.constant 0 : index
      %31 = vector.load %arg10[%c0_17, %c0_18, %c0_19] : memref<1x8x16xbf16, #tpu.memory_space<vmem>>, vector<1x8x16xbf16>
      %32 = vector.shape_cast %31 : vector<1x8x16xbf16> to vector<8x16xbf16>
      %33 = arith.extf %32 : vector<8x16xbf16> to vector<8x16xf32>
      %34 = arith.addf %30, %33 : vector<8x16xf32>
      %35 = arith.truncf %34 : vector<8x16xf32> to vector<8x16xbf16>
      %c0_20 = arith.constant 0 : index
      %c0_21 = arith.constant 0 : index
      %c0_22 = arith.constant 0 : index
      %36 = vector.load %arg11[%c0_20, %c0_21, %c0_22] : memref<1x16x32xbf16, #tpu.memory_space<vmem>>, vector<1x16x32xbf16>
      %37 = vector.shape_cast %36 : vector<1x16x32xbf16> to vector<16x32xbf16>
      %cst = arith.constant dense<0.000000e+00> : vector<8x32xf32>
      %38 = tpu.matmul %35, %37, %cst {dimension_numbers = #tpu.dot_dimension_numbers<[1], [0], [0], [1], [0, 0, 1, 1], [], []>} : vector<8x16xbf16>, vector<16x32xbf16>, vector<8x32xf32> -> vector<8x32xf32>
      %c0_23 = arith.constant 0 : index
      %c0_24 = arith.constant 0 : index
      %39 = vector.load %arg16[%c0_23, %c0_24] : memref<8x32xf32, #tpu.memory_space<vmem>>, vector<8x32xf32>
      %40 = arith.addf %39, %38 : vector<8x32xf32>
      %c0_25 = arith.constant 0 : index
      %c0_26 = arith.constant 0 : index
      %41 = vector.load %arg16[%c0_25, %c0_26] : memref<8x32xf32, #tpu.memory_space<vmem>>, vector<8x32xf32>
      tpu.vector_store %arg16[%c0_25, %c0_26], %40 {strides = array<i32>} : memref<8x32xf32, #tpu.memory_space<vmem>>, vector<8x32xf32>,
    } else {
    }
    %c2_i32 = arith.constant 2 : i32
    %6 = arith.cmpi eq, %arg2, %c2_i32 : i32
    %7 = arith.extui %6 : i1 to i32
    %c0_i32_2 = arith.constant 0 : i32
    %8 = arith.cmpi ne, %7, %c0_i32_2 : i32
    scf.if %8 {
      %c0 = arith.constant 0 : index
      %c0_5 = arith.constant 0 : index
      %c0_6 = arith.constant 0 : index
      %15 = vector.load %arg5[%c0, %c0_5, %c0_6] : memref<1x8x16xf32, #tpu.memory_space<vmem>>, vector<1x8x16xf32>
      %16 = vector.shape_cast %15 : vector<1x8x16xf32> to vector<8x16xf32>
      %c0_7 = arith.constant 0 : index
      %c0_8 = arith.constant 0 : index
      %17 = vector.load %arg14[%c0_7, %c0_8] : memref<8x1xf32, #tpu.memory_space<vmem>>, vector<8x1xf32>
      %c0_9 = arith.constant 0 : index
      %c0_10 = arith.constant 0 : index
      %18 = vector.load %arg15[%c0_9, %c0_10] : memref<8x1xf32, #tpu.memory_space<vmem>>, vector<8x1xf32>
      %19 = vector.broadcast %17 : vector<8x1xf32> to vector<8x16xf32>
      %20 = arith.subf %16, %19 : vector<8x16xf32>
      %21 = vector.broadcast %18 : vector<8x1xf32> to vector<8x16xf32>
      %22 = arith.mulf %20, %21 : vector<8x16xf32>
      %c0_11 = arith.constant 0 : index
      %c0_12 = arith.constant 0 : index
      %c0_13 = arith.constant 0 : index
      %23 = vector.load %arg8[%c0_11, %c0_12, %c0_13] : memref<1x1x16xf32, #tpu.memory_space<vmem>>, vector<1x1x16xf32>
      %24 = vector.shape_cast %23 : vector<1x1x16xf32> to vector<1x16xf32>
      %25 = vector.broadcast %24 : vector<1x16xf32> to vector<8x16xf32>
      %26 = arith.mulf %22, %25 : vector<8x16xf32>
      %c0_14 = arith.constant 0 : index
      %c0_15 = arith.constant 0 : index
      %c0_16 = arith.constant 0 : index
      %27 = vector.load %arg9[%c0_14, %c0_15, %c0_16] : memref<1x1x16xf32, #tpu.memory_space<vmem>>, vector<1x1x16xf32>
      %28 = vector.shape_cast %27 : vector<1x1x16xf32> to vector<1x16xf32>
      %29 = vector.broadcast %28 : vector<1x16xf32> to vector<8x16xf32>
      %30 = arith.addf %26, %29 : vector<8x16xf32>
      %c0_17 = arith.constant 0 : index
      %c0_18 = arith.constant 0 : index
      %c0_19 = arith.constant 0 : index
      %31 = vector.load %arg10[%c0_17, %c0_18, %c0_19] : memref<1x8x16xbf16, #tpu.memory_space<vmem>>, vector<1x8x16xbf16>
      %32 = vector.shape_cast %31 : vector<1x8x16xbf16> to vector<8x16xbf16>
      %33 = arith.extf %32 : vector<8x16xbf16> to vector<8x16xf32>
      %34 = arith.addf %30, %33 : vector<8x16xf32>
      %35 = arith.truncf %34 : vector<8x16xf32> to vector<8x16xbf16>
      %c0_20 = arith.constant 0 : index
      %c0_21 = arith.constant 0 : index
      %c0_22 = arith.constant 0 : index
      %36 = vector.load %arg11[%c0_20, %c0_21, %c0_22] : memref<1x16x32xbf16, #tpu.memory_space<vmem>>, vector<1x16x32xbf16>
      %37 = vector.shape_cast %36 : vector<1x16x32xbf16> to vector<16x32xbf16>
      %cst = arith.constant dense<0.000000e+00> : vector<8x32xf32>
      %38 = tpu.matmul %35, %37, %cst {dimension_numbers = #tpu.dot_dimension_numbers<[1], [0], [0], [1], [0, 0, 1, 1], [], []>} : vector<8x16xbf16>, vector<16x32xbf16>, vector<8x32xf32> -> vector<8x32xf32>
      %c0_23 = arith.constant 0 : index
      %c0_24 = arith.constant 0 : index
      %39 = vector.load %arg16[%c0_23, %c0_24] : memref<8x32xf32, #tpu.memory_space<vmem>>, vector<8x32xf32>
      %40 = arith.addf %39, %38 : vector<8x32xf32>
      %c0_25 = arith.constant 0 : index
      %c0_26 = arith.constant 0 : index
      %41 = vector.load %arg16[%c0_25, %c0_26] : memref<8x32xf32, #tpu.memory_space<vmem>>, vector<8x32xf32>
      tpu.vector_store %arg16[%c0_25, %c0_26], %40 {strides = array<i32>} : memref<8x32xf32, #tpu.memory_space<vmem>>, vector<8x32xf32>,
    } else {
    }
    %c3_i32 = arith.constant 3 : i32
    %9 = arith.cmpi eq, %arg2, %c3_i32 : i32
    %10 = arith.extui %9 : i1 to i32
    %c0_i32_3 = arith.constant 0 : i32
    %11 = arith.cmpi ne, %10, %c0_i32_3 : i32
    scf.if %11 {
      %c0 = arith.constant 0 : index
      %c0_5 = arith.constant 0 : index
      %c0_6 = arith.constant 0 : index
      %15 = vector.load %arg6[%c0, %c0_5, %c0_6] : memref<1x8x16xf32, #tpu.memory_space<vmem>>, vector<1x8x16xf32>
      %16 = vector.shape_cast %15 : vector<1x8x16xf32> to vector<8x16xf32>
      %c0_7 = arith.constant 0 : index
      %c0_8 = arith.constant 0 : index
      %17 = vector.load %arg14[%c0_7, %c0_8] : memref<8x1xf32, #tpu.memory_space<vmem>>, vector<8x1xf32>
      %c0_9 = arith.constant 0 : index
      %c0_10 = arith.constant 0 : index
      %18 = vector.load %arg15[%c0_9, %c0_10] : memref<8x1xf32, #tpu.memory_space<vmem>>, vector<8x1xf32>
      %19 = vector.broadcast %17 : vector<8x1xf32> to vector<8x16xf32>
      %20 = arith.subf %16, %19 : vector<8x16xf32>
      %21 = vector.broadcast %18 : vector<8x1xf32> to vector<8x16xf32>
      %22 = arith.mulf %20, %21 : vector<8x16xf32>
      %c0_11 = arith.constant 0 : index
      %c0_12 = arith.constant 0 : index
      %c0_13 = arith.constant 0 : index
      %23 = vector.load %arg8[%c0_11, %c0_12, %c0_13] : memref<1x1x16xf32, #tpu.memory_space<vmem>>, vector<1x1x16xf32>
      %24 = vector.shape_cast %23 : vector<1x1x16xf32> to vector<1x16xf32>
      %25 = vector.broadcast %24 : vector<1x16xf32> to vector<8x16xf32>
      %26 = arith.mulf %22, %25 : vector<8x16xf32>
      %c0_14 = arith.constant 0 : index
      %c0_15 = arith.constant 0 : index
      %c0_16 = arith.constant 0 : index
      %27 = vector.load %arg9[%c0_14, %c0_15, %c0_16] : memref<1x1x16xf32, #tpu.memory_space<vmem>>, vector<1x1x16xf32>
      %28 = vector.shape_cast %27 : vector<1x1x16xf32> to vector<1x16xf32>
      %29 = vector.broadcast %28 : vector<1x16xf32> to vector<8x16xf32>
      %30 = arith.addf %26, %29 : vector<8x16xf32>
      %c0_17 = arith.constant 0 : index
      %c0_18 = arith.constant 0 : index
      %c0_19 = arith.constant 0 : index
      %31 = vector.load %arg10[%c0_17, %c0_18, %c0_19] : memref<1x8x16xbf16, #tpu.memory_space<vmem>>, vector<1x8x16xbf16>
      %32 = vector.shape_cast %31 : vector<1x8x16xbf16> to vector<8x16xbf16>
      %33 = arith.extf %32 : vector<8x16xbf16> to vector<8x16xf32>
      %34 = arith.addf %30, %33 : vector<8x16xf32>
      %35 = arith.truncf %34 : vector<8x16xf32> to vector<8x16xbf16>
      %c0_20 = arith.constant 0 : index
      %c0_21 = arith.constant 0 : index
      %c0_22 = arith.constant 0 : index
      %36 = vector.load %arg11[%c0_20, %c0_21, %c0_22] : memref<1x16x32xbf16, #tpu.memory_space<vmem>>, vector<1x16x32xbf16>
      %37 = vector.shape_cast %36 : vector<1x16x32xbf16> to vector<16x32xbf16>
      %cst = arith.constant dense<0.000000e+00> : vector<8x32xf32>
      %38 = tpu.matmul %35, %37, %cst {dimension_numbers = #tpu.dot_dimension_numbers<[1], [0], [0], [1], [0, 0, 1, 1], [], []>} : vector<8x16xbf16>, vector<16x32xbf16>, vector<8x32xf32> -> vector<8x32xf32>
      %c0_23 = arith.constant 0 : index
      %c0_24 = arith.constant 0 : index
      %39 = vector.load %arg16[%c0_23, %c0_24] : memref<8x32xf32, #tpu.memory_space<vmem>>, vector<8x32xf32>
      %40 = arith.addf %39, %38 : vector<8x32xf32>
      %c0_25 = arith.constant 0 : index
      %c0_26 = arith.constant 0 : index
      %41 = vector.load %arg16[%c0_25, %c0_26] : memref<8x32xf32, #tpu.memory_space<vmem>>, vector<8x32xf32>
      tpu.vector_store %arg16[%c0_25, %c0_26], %40 {strides = array<i32>} : memref<8x32xf32, #tpu.memory_space<vmem>>, vector<8x32xf32>,
    } else {
    }
    %c4_i32 = arith.constant 4 : i32
    %12 = arith.cmpi eq, %arg2, %c4_i32 : i32
    %13 = arith.extui %12 : i1 to i32
    %c0_i32_4 = arith.constant 0 : i32
    %14 = arith.cmpi ne, %13, %c0_i32_4 : i32
    scf.if %14 {
      %c0 = arith.constant 0 : index
      %c0_5 = arith.constant 0 : index
      %c0_6 = arith.constant 0 : index
      %15 = vector.load %arg7[%c0, %c0_5, %c0_6] : memref<1x8x16xf32, #tpu.memory_space<vmem>>, vector<1x8x16xf32>
      %16 = vector.shape_cast %15 : vector<1x8x16xf32> to vector<8x16xf32>
      %c0_7 = arith.constant 0 : index
      %c0_8 = arith.constant 0 : index
      %17 = vector.load %arg14[%c0_7, %c0_8] : memref<8x1xf32, #tpu.memory_space<vmem>>, vector<8x1xf32>
      %c0_9 = arith.constant 0 : index
      %c0_10 = arith.constant 0 : index
      %18 = vector.load %arg15[%c0_9, %c0_10] : memref<8x1xf32, #tpu.memory_space<vmem>>, vector<8x1xf32>
      %19 = vector.broadcast %17 : vector<8x1xf32> to vector<8x16xf32>
      %20 = arith.subf %16, %19 : vector<8x16xf32>
      %21 = vector.broadcast %18 : vector<8x1xf32> to vector<8x16xf32>
      %22 = arith.mulf %20, %21 : vector<8x16xf32>
      %c0_11 = arith.constant 0 : index
      %c0_12 = arith.constant 0 : index
      %c0_13 = arith.constant 0 : index
      %23 = vector.load %arg8[%c0_11, %c0_12, %c0_13] : memref<1x1x16xf32, #tpu.memory_space<vmem>>, vector<1x1x16xf32>
      %24 = vector.shape_cast %23 : vector<1x1x16xf32> to vector<1x16xf32>
      %25 = vector.broadcast %24 : vector<1x16xf32> to vector<8x16xf32>
      %26 = arith.mulf %22, %25 : vector<8x16xf32>
      %c0_14 = arith.constant 0 : index
      %c0_15 = arith.constant 0 : index
      %c0_16 = arith.constant 0 : index
      %27 = vector.load %arg9[%c0_14, %c0_15, %c0_16] : memref<1x1x16xf32, #tpu.memory_space<vmem>>, vector<1x1x16xf32>
      %28 = vector.shape_cast %27 : vector<1x1x16xf32> to vector<1x16xf32>
      %29 = vector.broadcast %28 : vector<1x16xf32> to vector<8x16xf32>
      %30 = arith.addf %26, %29 : vector<8x16xf32>
      %c0_17 = arith.constant 0 : index
      %c0_18 = arith.constant 0 : index
      %c0_19 = arith.constant 0 : index
      %31 = vector.load %arg10[%c0_17, %c0_18, %c0_19] : memref<1x8x16xbf16, #tpu.memory_space<vmem>>, vector<1x8x16xbf16>
      %32 = vector.shape_cast %31 : vector<1x8x16xbf16> to vector<8x16xbf16>
      %33 = arith.extf %32 : vector<8x16xbf16> to vector<8x16xf32>
      %34 = arith.addf %30, %33 : vector<8x16xf32>
      %35 = arith.truncf %34 : vector<8x16xf32> to vector<8x16xbf16>
      %c0_20 = arith.constant 0 : index
      %c0_21 = arith.constant 0 : index
      %c0_22 = arith.constant 0 : index
      %36 = vector.load %arg11[%c0_20, %c0_21, %c0_22] : memref<1x16x32xbf16, #tpu.memory_space<vmem>>, vector<1x16x32xbf16>
      %37 = vector.shape_cast %36 : vector<1x16x32xbf16> to vector<16x32xbf16>
      %cst = arith.constant dense<0.000000e+00> : vector<8x32xf32>
      %38 = tpu.matmul %35, %37, %cst {dimension_numbers = #tpu.dot_dimension_numbers<[1], [0], [0], [1], [0, 0, 1, 1], [], []>} : vector<8x16xbf16>, vector<16x32xbf16>, vector<8x32xf32> -> vector<8x32xf32>
      %c0_23 = arith.constant 0 : index
      %c0_24 = arith.constant 0 : index
      %39 = vector.load %arg16[%c0_23, %c0_24] : memref<8x32xf32, #tpu.memory_space<vmem>>, vector<8x32xf32>
      %40 = arith.addf %39, %38 : vector<8x32xf32>
      %c0_25 = arith.constant 0 : index
      %c0_26 = arith.constant 0 : index
      %41 = vector.load %arg16[%c0_25, %c0_26] : memref<8x32xf32, #tpu.memory_space<vmem>>, vector<8x32xf32>
      tpu.vector_store %arg16[%c0_25, %c0_26], %40 {strides = array<i32>} : memref<8x32xf32, #tpu.memory_space<vmem>>, vector<8x32xf32>,
      %c0_27 = arith.constant 0 : index
      %c0_28 = arith.constant 0 : index
      %42 = vector.load %arg16[%c0_27, %c0_28] : memref<8x32xf32, #tpu.memory_space<vmem>>, vector<8x32xf32>
      %c0_29 = arith.constant 0 : index
      %c0_30 = arith.constant 0 : index
      %43 = vector.load %arg12[%c0_29, %c0_30] : memref<1x32xf32, #tpu.memory_space<vmem>>, vector<1x32xf32>
      %44 = vector.broadcast %43 : vector<1x32xf32> to vector<8x32xf32>
      %45 = arith.addf %42, %44 : vector<8x32xf32>
      %cst_31 = arith.constant 5.000000e-01 : f32
      %46 = vector.broadcast %cst_31 : f32 to vector<8x32xf32>
      %47 = arith.mulf %46, %45 : vector<8x32xf32>
      %cst_32 = arith.constant 0.707106769 : f32
      %48 = vector.broadcast %cst_32 : f32 to vector<8x32xf32>
      %49 = arith.mulf %45, %48 : vector<8x32xf32>
      %50 = math.erf %49 : vector<8x32xf32>
      %cst_33 = arith.constant 1.000000e+00 : f32
      %51 = vector.broadcast %cst_33 : f32 to vector<8x32xf32>
      %52 = arith.addf %51, %50 : vector<8x32xf32>
      %53 = arith.mulf %47, %52 : vector<8x32xf32>
      %54 = arith.truncf %53 : vector<8x32xf32> to vector<8x32xbf16>
      %c0_34 = arith.constant 0 : index
      %c0_35 = arith.constant 0 : index
      %c0_36 = arith.constant 0 : index
      %55 = vector.load %arg13[%c0_34, %c0_35, %c0_36] : memref<1x8x32xbf16, #tpu.memory_space<vmem>>, vector<1x8x32xbf16>
      %56 = vector.shape_cast %55 : vector<1x8x32xbf16> to vector<8x32xbf16>
      %57 = vector.shape_cast %54 : vector<8x32xbf16> to vector<1x8x32xbf16>
      tpu.vector_store %arg13[%c0_34, %c0_35, %c0_36], %57 {strides = array<i32>} : memref<1x8x32xbf16, #tpu.memory_space<vmem>>, vector<1x8x32xbf16>,
    } else {
    }
    return
  }
  func.func @transform_0(%arg0: i32, %arg1: i32, %arg2: i32) -> (i32, i32, i32) {
    %c0_i32 = arith.constant 0 : i32
    %c0_i32_0 = arith.constant 0 : i32
    return %arg0, %arg1, %c0_i32 : i32, i32, i32
  }
  func.func @transform_1(%arg0: i32, %arg1: i32, %arg2: i32) -> (i32, i32, i32) {
    %c0_i32 = arith.constant 0 : i32
    %c0_i32_0 = arith.constant 0 : i32
    return %arg0, %arg1, %c0_i32 : i32, i32, i32
  }
  func.func @transform_2(%arg0: i32, %arg1: i32, %arg2: i32) -> (i32, i32, i32) {
    %c0_i32 = arith.constant 0 : i32
    %c0_i32_0 = arith.constant 0 : i32
    return %arg0, %arg1, %c0_i32 : i32, i32, i32
  }
  func.func @transform_3(%arg0: i32, %arg1: i32, %arg2: i32) -> (i32, i32, i32) {
    %c0_i32 = arith.constant 0 : i32
    %c0_i32_0 = arith.constant 0 : i32
    return %arg0, %arg1, %c0_i32 : i32, i32, i32
  }
  func.func @transform_4(%arg0: i32, %arg1: i32, %arg2: i32) -> (i32, i32, i32) {
    %c0_i32 = arith.constant 0 : i32
    %c0_i32_0 = arith.constant 0 : i32
    return %arg0, %arg1, %c0_i32 : i32, i32, i32
  }
  func.func @transform_5(%arg0: i32, %arg1: i32, %arg2: i32) -> (i32, i32, i32) {
    %c0_i32 = arith.constant 0 : i32
    %c0_i32_0 = arith.constant 0 : i32
    %c0_i32_1 = arith.constant 0 : i32
    return %arg2, %c0_i32, %c0_i32_0 : i32, i32, i32
  }
  func.func @transform_6(%arg0: i32, %arg1: i32, %arg2: i32) -> (i32, i32, i32) {
    %c0_i32 = arith.constant 0 : i32
    %c0_i32_0 = arith.constant 0 : i32
    %c0_i32_1 = arith.constant 0 : i32
    return %arg2, %c0_i32, %c0_i32_0 : i32, i32, i32
  }
  func.func @transform_7(%arg0: i32, %arg1: i32, %arg2: i32) -> (i32, i32, i32) {
    %c0_i32 = arith.constant 0 : i32
    %c0_i32_0 = arith.constant 0 : i32
    return %arg2, %arg1, %c0_i32 : i32, i32, i32
  }
  func.func @transform_8(%arg0: i32, %arg1: i32, %arg2: i32) -> (i32, i32, i32) {
    %c0_i32 = arith.constant 0 : i32
    %c0_i32_0 = arith.constant 0 : i32
    %c0_i32_1 = arith.constant 0 : i32
    return %arg2, %c0_i32, %c0_i32_0 : i32, i32, i32
  }
  func.func @transform_9(%arg0: i32, %arg1: i32, %arg2: i32) -> (i32, i32) {
    %c0_i32 = arith.constant 0 : i32
    %c0_i32_0 = arith.constant 0 : i32
    %c0_i32_1 = arith.constant 0 : i32
    return %c0_i32, %c0_i32_0 : i32, i32
  }
  func.func @transform_10(%arg0: i32, %arg1: i32, %arg2: i32) -> (i32, i32, i32) {
    %c0_i32 = arith.constant 0 : i32
    %c0_i32_0 = arith.constant 0 : i32
    return %arg0, %arg1, %c0_i32 : i32, i32, i32
  }
}

</mosaic_0001>

<llo_original>
// kernel: tpu_custom_call.1
$region0: #{tpu_custom_call.1}
  #allocation0 [shape = 'u32[]', space=smem, size = 0x4, offset = 0x4, fixed_abs, tag = 'smem constant byte address 0x4 - core index']
  #allocation1 [shape = 'u32[72,128]{1,0:T(1,128)}', space=vmem, size = 0x9000, scoped, tag = 'internal scratch']
  #allocation2 [shape = 'f32[8,1]{1,0:T(8,128)}', space=vmem, size = 0x1000, scoped, tag = 'scratch operand']
  #allocation3 [shape = 'f32[8,1]{1,0:T(8,128)}', space=vmem, size = 0x1000, scoped, tag = 'scratch operand']
  #allocation4 [shape = 'f32[8,32]{1,0:T(8,128)}', space=vmem, size = 0x1000, scoped, tag = 'scratch operand']
  %s0 = inlined_call_operand.hbm [shape: f32[2,16,16], index: 0, kind: input, shape index: {}]
  %s1 = inlined_call_operand.hbm [shape: f32[2,16,16], index: 1, kind: input, shape index: {}]
  %s2 = inlined_call_operand.hbm [shape: f32[2,16,16], index: 2, kind: input, shape index: {}]
  %s3 = inlined_call_operand.hbm [shape: f32[2,16,16], index: 3, kind: input, shape index: {}]
  %s4 = inlined_call_operand.hbm [shape: f32[2,16,16], index: 4, kind: input, shape index: {}]
  %s5 = inlined_call_operand.hbm [shape: f32[5,1,16], index: 5, kind: input, shape index: {}]
  %s6 = inlined_call_operand.vmem [shape: f32[5,1,16], index: 6, kind: input, shape index: {}]
  %s7 = inlined_call_operand.hbm [shape: bf16[5,16,16], index: 7, kind: input, shape index: {}]
  %s8 = inlined_call_operand.hbm [shape: bf16[5,16,32], index: 8, kind: input, shape index: {}]
  %s9 = inlined_call_operand.vmem [shape: f32[1,32], index: 9, kind: input, shape index: {}]
  %s10 = inlined_call_operand.hbm [shape: bf16[2,16,32], index: 10, kind: output, shape index: {}]
  %s11 = sld [smem:[#allocation0]]
  $region125: #{tpu_custom_call.1} parent=0
    _
  %s13 = ssub.s32 1, %s11
  %s14 = scalar_select 0, %s13, %s11
  $region1: #{tpu_custom_call.1} parent=0
    #allocation5 [shape = 'u8[8192]{0}', space=vmem, size = 0x2000, scoped, tag = 'input window, operand 0']
    #allocation6 [shape = 's32[2]{0}', space=sflag, size = 0x8, scoped, tag = 'scoped memory for tpu_custom_call.1']
    #allocation7 [shape = 's32[2]{0}', space=sflag, size = 0x8, scoped, tag = 'scoped memory for tpu_custom_call.1']
    #allocation8 [shape = 'u8[8192]{0}', space=vmem, size = 0x2000, scoped, tag = 'input window, operand 1']
    #allocation9 [shape = 's32[2]{0}', space=sflag, size = 0x8, scoped, tag = 'scoped memory for tpu_custom_call.1']
    #allocation10 [shape = 'u8[8192]{0}', space=vmem, size = 0x2000, scoped, tag = 'input window, operand 2']
    #allocation11 [shape = 'u8[8192]{0}', space=vmem, size = 0x2000, scoped, tag = 'input window, operand 3']
    #allocation12 [shape = 's32[2]{0}', space=sflag, size = 0x8, scoped, tag = 'scoped memory for tpu_custom_call.1']
    #allocation13 [shape = 'u8[8192]{0}', space=vmem, size = 0x2000, scoped, tag = 'input window, operand 4']
    #allocation14 [shape = 'u8[1024]{0}', space=vmem, size = 0x400, scoped, tag = 'input window, operand 5']
    #allocation15 [shape = 's32[2]{0}', space=sflag, size = 0x8, scoped, tag = 'scoped memory for tpu_custom_call.1']
    #allocation16 [shape = 'u8[4096]{0}', space=vmem, size = 0x1000, scoped, tag = 'input window, operand 7']
    #allocation17 [shape = 'u8[8192]{0}', space=vmem, size = 0x2000, scoped, tag = 'input window, operand 8']
    #allocation18 [shape = 's32[2]{0}', space=sflag, size = 0x8, scoped, tag = 'scoped memory for tpu_custom_call.1']
    #allocation19 [shape = 'u8[4096]{0}', space=vmem, size = 0x1000, scoped, tag = 'output window, operand 0']
    %15 = vsyncpa [#allocation6], 0
    %s16 = scalar_lea.sflag [#allocation6], 1
    %17 = vsyncpa %s16, 0
    %18 = vsyncpa [#allocation9], 0
    %s19 = scalar_lea.sflag [#allocation9], 1
    %20 = vsyncpa %s19, 0
    %21 = vsyncpa [#allocation12], 0
    %s22 = scalar_lea.sflag [#allocation12], 1
    %23 = vsyncpa %s22, 0
    %24 = vsyncpa [#allocation15], 0
    %s25 = scalar_lea.sflag [#allocation15], 1
    %26 = vsyncpa %s25, 0
    %27 = vsyncpa [#allocation18], 0
    %s28 = scalar_lea.sflag [#allocation18], 1
    %29 = vsyncpa %s28, 0
    %30 = vsyncpa [#allocation7], 0
    %s31 = scalar_lea.sflag [#allocation7], 1
    %32 = vsyncpa %s31, 0
    loop: start=0, step=1, limit=22
    $region2: #{tpu_custom_call.1} parent=1 // loop_pre_header
      _
    $region3: #{tpu_custom_call.1} parent=1 // loop_header
      %s34 = sphi 0, %s38
      %p35 = scmp.ge.s32.totalorder %s34, 22
      %s41 = sphi 0, %s60
      %s42 = sphi 0, %s56
      %s43 = sphi 0, %s52
      %s44 = sphi 0, %s41
      %s45 = sphi 0, %s42
      %s46 = sphi 0, %s43
      %s47 = sphi 0, %s44
      %s48 = sphi 0, %s45
      %s49 = sphi 0, %s46
      %s65 = sphi 0, %s67
      %s68 = sphi 0, %s65
      %s69 = sphi 0, %s68
      %s85 = sphi 0, %s69
      %s93 = sphi 0, %s95
      %s96 = sphi 0, %s93
      %s97 = sphi 0, %s96
      %s113 = sphi 0, %s97
      %s121 = sphi 0, %s123
      %s124 = sphi 0, %s121
      %s125 = sphi 0, %s124
      %s141 = sphi 0, %s125
      %s149 = sphi 0, %s151
      %s152 = sphi 0, %s149
      %s153 = sphi 0, %s152
      %s169 = sphi 0, %s153
      %s177 = sphi 0, %s179
      %s180 = sphi 0, %s177
      %s181 = sphi 0, %s180
      %s197 = sphi 0, %s181
      %s203 = sphi 0, %s205
      %s206 = sphi 0, %s203
      %s207 = sphi 0, %s206
      %s223 = sphi 0, %s207
      %s229 = sphi 0, %s231
      %s232 = sphi 0, %s229
      %s233 = sphi 0, %s232
      %s249 = sphi 0, %s233
      %s257 = sphi 0, %s259
      %s260 = sphi 0, %s257
      %s261 = sphi 0, %s260
      %s277 = sphi 0, %s261
      %s283 = sphi 0, %s285
      %s286 = sphi 0, %s283
      %s287 = sphi 0, %s286
      %s303 = sphi 0, %s287
      %s307 = sphi 0, %s307
      %s309 = sphi 0, %s307
      %s310 = sphi 0, %s309
      %s324 = sphi 0, %s310
      %s332 = sphi 0, %s334
      %s335 = sphi 0, %s332
      %s336 = sphi 0, %s335
      %s352 = sphi 0, %s336
    $region4: #{tpu_custom_call.1} parent=1 // loop_header_branch
      %37 = sbr.rel (%p35) target = $region8
    $region5: #{tpu_custom_call.1} parent=1 // loop_body
      %s39 = ssub.s32 %s34, 1
      %s40 = ssub.s32 %s34, 2
      %s50 = sadd.s32 1, %s43
      %p51 = scmp.ge.s32.totalorder %s50, 5
      %s52 = scalar_select %p51, 0, %s50
      %s53 = sadd.s32 1, %s42
      %s54 = scalar_select %p51, %s53, %s42
      %p55 = scmp.ge.s32.totalorder %s54, 2
      %s56 = scalar_select %p55, 0, %s54
      %s57 = sadd.s32 1, %s41
      %s58 = scalar_select %p55, %s57, %s41
      %p59 = scmp.ge.s32.totalorder %s58, 2
      %s60 = scalar_select %p59, 0, %s58
      %s61 = ssub.s32 %s41, %s60
      %s62 = ssub.s32 %s42, %s56
      %s63 = sor.u32 %s61, %s62
      %p64 = scmp.eq.s32.totalorder %s63, 0
      %s66 = sadd.s32 %s65, 1
      %s67 = scalar_select %p64, %s65, %s66
      %p70 = pneg %p64
      %p71 = scmp.eq.s32.totalorder %s34, 19
      %p72 = por %p70, %p71
      %p73 = scmp.ne.s32.totalorder %s65, %s68
      %p74 = scmp.eq.s32.totalorder %s34, 0
      %p75 = por %p73, %p74
      %p76 = scmp.ne.s32.totalorder %s65, %s68
      %p77 = scmp.eq.s32.totalorder %s39, 19
      %p78 = por %p76, %p77
      %p79 = scmp.ne.s32.totalorder %s68, %s69
      %p80 = scmp.eq.s32.totalorder %s39, 0
      %p81 = por %p79, %p80
      %p82 = scmp.ne.s32.totalorder %s68, %s69
      %p83 = scmp.eq.s32.totalorder %s40, 19
      %p84 = por %p82, %p83
      %p86 = scmp.ne.s32.totalorder %s69, %s85
      %p87 = scmp.eq.s32.totalorder %s40, 0
      %p88 = por %p86, %p87
      %s89 = ssub.s32 %s41, %s60
      %s90 = ssub.s32 %s42, %s56
      %s91 = sor.u32 %s89, %s90
      %p92 = scmp.eq.s32.totalorder %s91, 0
      %s94 = sadd.s32 %s93, 1
      %s95 = scalar_select %p92, %s93, %s94
      %p98 = pneg %p92
      %p99 = scmp.eq.s32.totalorder %s34, 19
      %p100 = por %p98, %p99
      %p101 = scmp.ne.s32.totalorder %s93, %s96
      %p102 = scmp.eq.s32.totalorder %s34, 0
      %p103 = por %p101, %p102
      %p104 = scmp.ne.s32.totalorder %s93, %s96
      %p105 = scmp.eq.s32.totalorder %s39, 19
      %p106 = por %p104, %p105
      %p107 = scmp.ne.s32.totalorder %s96, %s97
      %p108 = scmp.eq.s32.totalorder %s39, 0
      %p109 = por %p107, %p108
      %p110 = scmp.ne.s32.totalorder %s96, %s97
      %p111 = scmp.eq.s32.totalorder %s40, 19
      %p112 = por %p110, %p111
      %p114 = scmp.ne.s32.totalorder %s97, %s113
      %p115 = scmp.eq.s32.totalorder %s40, 0
      %p116 = por %p114, %p115
      %s117 = ssub.s32 %s41, %s60
      %s118 = ssub.s32 %s42, %s56
      %s119 = sor.u32 %s117, %s118
      %p120 = scmp.eq.s32.totalorder %s119, 0
      %s122 = sadd.s32 %s121, 1
      %s123 = scalar_select %p120, %s121, %s122
      %p126 = pneg %p120
      %p127 = scmp.eq.s32.totalorder %s34, 19
      %p128 = por %p126, %p127
      %p129 = scmp.ne.s32.totalorder %s121, %s124
      %p130 = scmp.eq.s32.totalorder %s34, 0
      %p131 = por %p129, %p130
      %p132 = scmp.ne.s32.totalorder %s121, %s124
      %p133 = scmp.eq.s32.totalorder %s39, 19
      %p134 = por %p132, %p133
      %p135 = scmp.ne.s32.totalorder %s124, %s125
      %p136 = scmp.eq.s32.totalorder %s39, 0
      %p137 = por %p135, %p136
      %p138 = scmp.ne.s32.totalorder %s124, %s125
      %p139 = scmp.eq.s32.totalorder %s40, 19
      %p140 = por %p138, %p139
      %p142 = scmp.ne.s32.totalorder %s125, %s141
      %p143 = scmp.eq.s32.totalorder %s40, 0
      %p144 = por %p142, %p143
      %s145 = ssub.s32 %s41, %s60
      %s146 = ssub.s32 %s42, %s56
      %s147 = sor.u32 %s145, %s146
      %p148 = scmp.eq.s32.totalorder %s147, 0
      %s150 = sadd.s32 %s149, 1
      %s151 = scalar_select %p148, %s149, %s150
      %p154 = pneg %p148
      %p155 = scmp.eq.s32.totalorder %s34, 19
      %p156 = por %p154, %p155
      %p157 = scmp.ne.s32.totalorder %s149, %s152
      %p158 = scmp.eq.s32.totalorder %s34, 0
      %p159 = por %p157, %p158
      %p160 = scmp.ne.s32.totalorder %s149, %s152
      %p161 = scmp.eq.s32.totalorder %s39, 19
      %p162 = por %p160, %p161
      %p163 = scmp.ne.s32.totalorder %s152, %s153
      %p164 = scmp.eq.s32.totalorder %s39, 0
      %p165 = por %p163, %p164
      %p166 = scmp.ne.s32.totalorder %s152, %s153
      %p167 = scmp.eq.s32.totalorder %s40, 19
      %p168 = por %p166, %p167
      %p170 = scmp.ne.s32.totalorder %s153, %s169
      %p171 = scmp.eq.s32.totalorder %s40, 0
      %p172 = por %p170, %p171
      %s173 = ssub.s32 %s41, %s60
      %s174 = ssub.s32 %s42, %s56
      %s175 = sor.u32 %s173, %s174
      %p176 = scmp.eq.s32.totalorder %s175, 0
      %s178 = sadd.s32 %s177, 1
      %s179 = scalar_select %p176, %s177, %s178
      %p182 = pneg %p176
      %p183 = scmp.eq.s32.totalorder %s34, 19
      %p184 = por %p182, %p183
      %p185 = scmp.ne.s32.totalorder %s177, %s180
      %p186 = scmp.eq.s32.totalorder %s34, 0
      %p187 = por %p185, %p186
      %p188 = scmp.ne.s32.totalorder %s177, %s180
      %p189 = scmp.eq.s32.totalorder %s39, 19
      %p190 = por %p188, %p189
      %p191 = scmp.ne.s32.totalorder %s180, %s181
      %p192 = scmp.eq.s32.totalorder %s39, 0
      %p193 = por %p191, %p192
      %p194 = scmp.ne.s32.totalorder %s180, %s181
      %p195 = scmp.eq.s32.totalorder %s40, 19
      %p196 = por %p194, %p195
      %p198 = scmp.ne.s32.totalorder %s181, %s197
      %p199 = scmp.eq.s32.totalorder %s40, 0
      %p200 = por %p198, %p199
      %s201 = ssub.s32 %s43, %s52
      %p202 = scmp.eq.s32.totalorder %s201, 0
      %s204 = sadd.s32 %s203, 1
      %s205 = scalar_select %p202, %s203, %s204
      %p208 = pneg %p202
      %p209 = scmp.eq.s32.totalorder %s34, 19
      %p210 = por %p208, %p209
      %p211 = scmp.ne.s32.totalorder %s203, %s206
      %p212 = scmp.eq.s32.totalorder %s34, 0
      %p213 = por %p211, %p212
      %p214 = scmp.ne.s32.totalorder %s203, %s206
      %p215 = scmp.eq.s32.totalorder %s39, 19
      %p216 = por %p214, %p215
      %p217 = scmp.ne.s32.totalorder %s206, %s207
      %p218 = scmp.eq.s32.totalorder %s39, 0
      %p219 = por %p217, %p218
      %p220 = scmp.ne.s32.totalorder %s206, %s207
      %p221 = scmp.eq.s32.totalorder %s40, 19
      %p222 = por %p220, %p221
      %p224 = scmp.ne.s32.totalorder %s207, %s223
      %p225 = scmp.eq.s32.totalorder %s40, 0
      %p226 = por %p224, %p225
      %s227 = ssub.s32 %s43, %s52
      %p228 = scmp.eq.s32.totalorder %s227, 0
      %s230 = sadd.s32 %s229, 1
      %s231 = scalar_select %p228, %s229, %s230
      %p234 = pneg %p228
      %p235 = scmp.eq.s32.totalorder %s34, 19
      %p236 = por %p234, %p235
      %p237 = scmp.ne.s32.totalorder %s229, %s232
      %p238 = scmp.eq.s32.totalorder %s34, 0
      %p239 = por %p237, %p238
      %p240 = scmp.ne.s32.totalorder %s229, %s232
      %p241 = scmp.eq.s32.totalorder %s39, 19
      %p242 = por %p240, %p241
      %p243 = scmp.ne.s32.totalorder %s232, %s233
      %p244 = scmp.eq.s32.totalorder %s39, 0
      %p245 = por %p243, %p244
      %p246 = scmp.ne.s32.totalorder %s232, %s233
      %p247 = scmp.eq.s32.totalorder %s40, 19
      %p248 = por %p246, %p247
      %p250 = scmp.ne.s32.totalorder %s233, %s249
      %p251 = scmp.eq.s32.totalorder %s40, 0
      %p252 = por %p250, %p251
      %s253 = ssub.s32 %s43, %s52
      %s254 = ssub.s32 %s42, %s56
      %s255 = sor.u32 %s253, %s254
      %p256 = scmp.eq.s32.totalorder %s255, 0
      %s258 = sadd.s32 %s257, 1
      %s259 = scalar_select %p256, %s257, %s258
      %p262 = pneg %p256
      %p263 = scmp.eq.s32.totalorder %s34, 19
      %p264 = por %p262, %p263
      %p265 = scmp.ne.s32.totalorder %s257, %s260
      %p266 = scmp.eq.s32.totalorder %s34, 0
      %p267 = por %p265, %p266
      %p268 = scmp.ne.s32.totalorder %s257, %s260
      %p269 = scmp.eq.s32.totalorder %s39, 19
      %p270 = por %p268, %p269
      %p271 = scmp.ne.s32.totalorder %s260, %s261
      %p272 = scmp.eq.s32.totalorder %s39, 0
      %p273 = por %p271, %p272
      %p274 = scmp.ne.s32.totalorder %s260, %s261
      %p275 = scmp.eq.s32.totalorder %s40, 19
      %p276 = por %p274, %p275
      %p278 = scmp.ne.s32.totalorder %s261, %s277
      %p279 = scmp.eq.s32.totalorder %s40, 0
      %p280 = por %p278, %p279
      %s281 = ssub.s32 %s43, %s52
      %p282 = scmp.eq.s32.totalorder %s281, 0
      %s284 = sadd.s32 %s283, 1
      %s285 = scalar_select %p282, %s283, %s284
      %p288 = pneg %p282
      %p289 = scmp.eq.s32.totalorder %s34, 19
      %p290 = por %p288, %p289
      %p291 = scmp.ne.s32.totalorder %s283, %s286
      %p292 = scmp.eq.s32.totalorder %s34, 0
      %p293 = por %p291, %p292
      %p294 = scmp.ne.s32.totalorder %s283, %s286
      %p295 = scmp.eq.s32.totalorder %s39, 19
      %p296 = por %p294, %p295
      %p297 = scmp.ne.s32.totalorder %s286, %s287
      %p298 = scmp.eq.s32.totalorder %s39, 0
      %p299 = por %p297, %p298
      %p300 = scmp.ne.s32.totalorder %s286, %s287
      %p301 = scmp.eq.s32.totalorder %s40, 19
      %p302 = por %p300, %p301
      %p304 = scmp.ne.s32.totalorder %s287, %s303
      %p305 = scmp.eq.s32.totalorder %s40, 0
      %p306 = por %p304, %p305
      %s308 = sadd.s32 %s307, 1
      %p311 = scmp.eq.s32.totalorder %s34, 19
      %p312 = scmp.ne.s32.totalorder %s307, %s309
      %p313 = scmp.eq.s32.totalorder %s34, 0
      %p314 = por %p312, %p313
      %p315 = scmp.ne.s32.totalorder %s307, %s309
      %p316 = scmp.eq.s32.totalorder %s39, 19
      %p317 = por %p315, %p316
      %p318 = scmp.ne.s32.totalorder %s309, %s310
      %p319 = scmp.eq.s32.totalorder %s39, 0
      %p320 = por %p318, %p319
      %p321 = scmp.ne.s32.totalorder %s309, %s310
      %p322 = scmp.eq.s32.totalorder %s40, 19
      %p323 = por %p321, %p322
      %p325 = scmp.ne.s32.totalorder %s310, %s324
      %p326 = scmp.eq.s32.totalorder %s40, 0
      %p327 = por %p325, %p326
      %s328 = ssub.s32 %s41, %s60
      %s329 = ssub.s32 %s42, %s56
      %s330 = sor.u32 %s328, %s329
      %p331 = scmp.eq.s32.totalorder %s330, 0
      %s333 = sadd.s32 %s332, 1
      %s334 = scalar_select %p331, %s332, %s333
      %p337 = pneg %p331
      %p338 = scmp.eq.s32.totalorder %s34, 19
      %p339 = por %p337, %p338
      %p340 = scmp.ne.s32.totalorder %s332, %s335
      %p341 = scmp.eq.s32.totalorder %s34, 0
      %p342 = por %p340, %p341
      %p343 = scmp.ne.s32.totalorder %s332, %s335
      %p344 = scmp.eq.s32.totalorder %s39, 19
      %p345 = por %p343, %p344
      %p346 = scmp.ne.s32.totalorder %s335, %s336
      %p347 = scmp.eq.s32.totalorder %s39, 0
      %p348 = por %p346, %p347
      %p349 = scmp.ne.s32.totalorder %s335, %s336
      %p350 = scmp.eq.s32.totalorder %s40, 19
      %p351 = por %p349, %p350
      %p353 = scmp.ne.s32.totalorder %s336, %s352
      %p354 = scmp.eq.s32.totalorder %s40, 0
      %p355 = por %p353, %p354
      %p356 = scmp.le.s32.totalorder 1, %s34
      %p357 = scmp.lt.s32.totalorder %s34, 21
      %p358 = pnand %p356, %p357
      %p359 = pneg %p358
      // Predicated region
      $region9: #{tpu_custom_call.1} parent=5 // pred_check
        _
      $region10: #{tpu_custom_call.1} parent=5 // pred_check_branch
        %361 = sbr.rel (%p358) target = $region12
      $region11: #{tpu_custom_call.1} parent=5 // pred_region
        %s362 = ssub.s32 %s34, 1
        // Predicated region
        $region13: #{tpu_custom_call.1} parent=11 // pred_check
          %p363 = pneg %p320
        $region14: #{tpu_custom_call.1} parent=11 // pred_check_branch
          %365 = sbr.rel (%p363) target = $region16
        $region15: #{tpu_custom_call.1} parent=11 // pred_region
          _
        $region16: #{tpu_custom_call.1} parent=11 // pred_fallthru
          _
      $region12: #{tpu_custom_call.1} parent=5 // pred_fallthru
        _
      %p366 = scmp.lt.s32.totalorder %s34, 20
      // Predicated region
      $region17: #{tpu_custom_call.1} parent=5 // pred_check
        %p367 = pneg %p366
      $region18: #{tpu_custom_call.1} parent=5 // pred_check_branch
        %369 = sbr.rel (%p367) target = $region20
      $region19: #{tpu_custom_call.1} parent=5 // pred_region
        // Predicated region
        $region21: #{tpu_custom_call.1} parent=19 // pred_check
          %p370 = pneg %p75
        $region22: #{tpu_custom_call.1} parent=19 // pred_check_branch
          %372 = sbr.rel (%p370) target = $region24
        $region23: #{tpu_custom_call.1} parent=19 // pred_region
          %s373 = sand.u32 %s65, 1
          %s374 = scalar_lea.sflag [#allocation6], %s373
          %s375 = sand.u32 %s65, 1
          %s376 = smul.addr %s375, 8
          %s377 = scalar_lea.vmem [#allocation5], %s376
          %379 = vsyncadd %s374, 0
          %s380 = smul.addr %s41, 2
          %s381 = sadd.s32 %s42, %s380
          %s382 = smul.addr %s381, 8
          %s383 = scalar_lea.hbm %s0, %s382
          %s385 = sshll.u32 %s383, 4
          %s386 = int_to_ptr.hbm [resolvable:$true] %s385
          %s387 = sshll.u32 %s377, 4
          %s388 = int_to_ptr.vmem [resolvable:$true] %s387
          %390 = dma.hbm_to_vmem [thread:$0]  %s386, 128, %s388, %s374
        $region24: #{tpu_custom_call.1} parent=19 // pred_fallthru
          _
        // Predicated region
        $region25: #{tpu_custom_call.1} parent=19 // pred_check
          %p391 = pneg %p103
        $region26: #{tpu_custom_call.1} parent=19 // pred_check_branch
          %393 = sbr.rel (%p391) target = $region28
        $region27: #{tpu_custom_call.1} parent=19 // pred_region
          %s394 = sand.u32 %s34, 1
          %s395 = scalar_lea.sflag [#allocation9], %s394
          %s396 = sand.u32 %s93, 1
          %s397 = smul.addr %s396, 8
          %s398 = scalar_lea.vmem [#allocation8], %s397
          %400 = vsyncadd %s395, 0
          %s401 = smul.addr %s41, 2
          %s402 = sadd.s32 %s42, %s401
          %s403 = smul.addr %s402, 8
          %s404 = scalar_lea.hbm %s1, %s403
          %s406 = sshll.u32 %s404, 4
          %s407 = int_to_ptr.hbm [resolvable:$true] %s406
          %s408 = sshll.u32 %s398, 4
          %s409 = int_to_ptr.vmem [resolvable:$true] %s408
          %411 = dma.hbm_to_vmem [thread:$0]  %s407, 128, %s409, %s395
        $region28: #{tpu_custom_call.1} parent=19 // pred_fallthru
          _
        // Predicated region
        $region29: #{tpu_custom_call.1} parent=19 // pred_check
          %p412 = pneg %p131
        $region30: #{tpu_custom_call.1} parent=19 // pred_check_branch
          %414 = sbr.rel (%p412) target = $region32
        $region31: #{tpu_custom_call.1} parent=19 // pred_region
          %s415 = sand.u32 %s34, 1
          %s416 = scalar_lea.sflag [#allocation9], %s415
          %s417 = sand.u32 %s121, 1
          %s418 = smul.addr %s417, 8
          %s419 = scalar_lea.vmem [#allocation10], %s418
          %421 = vsyncadd %s416, 0
          %s422 = smul.addr %s41, 2
          %s423 = sadd.s32 %s42, %s422
          %s424 = smul.addr %s423, 8
          %s425 = scalar_lea.hbm %s2, %s424
          %s427 = sshll.u32 %s425, 4
          %s428 = int_to_ptr.hbm [resolvable:$true] %s427
          %s429 = sshll.u32 %s419, 4
          %s430 = int_to_ptr.vmem [resolvable:$true] %s429
          %432 = dma.hbm_to_vmem [thread:$0]  %s428, 128, %s430, %s416
        $region32: #{tpu_custom_call.1} parent=19 // pred_fallthru
          _
        // Predicated region
        $region33: #{tpu_custom_call.1} parent=19 // pred_check
          %p433 = pneg %p159
        $region34: #{tpu_custom_call.1} parent=19 // pred_check_branch
          %435 = sbr.rel (%p433) target = $region36
        $region35: #{tpu_custom_call.1} parent=19 // pred_region
          %s436 = sand.u32 %s34, 1
          %s437 = scalar_lea.sflag [#allocation12], %s436
          %s438 = sand.u32 %s149, 1
          %s439 = smul.addr %s438, 8
          %s440 = scalar_lea.vmem [#allocation11], %s439
          %442 = vsyncadd %s437, 0
          %s443 = smul.addr %s41, 2
          %s444 = sadd.s32 %s42, %s443
          %s445 = smul.addr %s444, 8
          %s446 = scalar_lea.hbm %s3, %s445
          %s448 = sshll.u32 %s446, 4
          %s449 = int_to_ptr.hbm [resolvable:$true] %s448
          %s450 = sshll.u32 %s440, 4
          %s451 = int_to_ptr.vmem [resolvable:$true] %s450
          %453 = dma.hbm_to_vmem [thread:$0]  %s449, 128, %s451, %s437
        $region36: #{tpu_custom_call.1} parent=19 // pred_fallthru
          _
        // Predicated region
        $region37: #{tpu_custom_call.1} parent=19 // pred_check
          %p454 = pneg %p187
        $region38: #{tpu_custom_call.1} parent=19 // pred_check_branch
          %456 = sbr.rel (%p454) target = $region40
        $region39: #{tpu_custom_call.1} parent=19 // pred_region
          %s457 = sand.u32 %s34, 1
          %s458 = scalar_lea.sflag [#allocation12], %s457
          %s459 = sand.u32 %s177, 1
          %s460 = smul.addr %s459, 8
          %s461 = scalar_lea.vmem [#allocation13], %s460
          %463 = vsyncadd %s458, 0
          %s464 = smul.addr %s41, 2
          %s465 = sadd.s32 %s42, %s464
          %s466 = smul.addr %s465, 8
          %s467 = scalar_lea.hbm %s4, %s466
          %s469 = sshll.u32 %s467, 4
          %s470 = int_to_ptr.hbm [resolvable:$true] %s469
          %s471 = sshll.u32 %s461, 4
          %s472 = int_to_ptr.vmem [resolvable:$true] %s471
          %474 = dma.hbm_to_vmem [thread:$0]  %s470, 128, %s472, %s458
        $region40: #{tpu_custom_call.1} parent=19 // pred_fallthru
          _
        // Predicated region
        $region41: #{tpu_custom_call.1} parent=19 // pred_check
          %p475 = pneg %p213
        $region42: #{tpu_custom_call.1} parent=19 // pred_check_branch
          %477 = sbr.rel (%p475) target = $region44
        $region43: #{tpu_custom_call.1} parent=19 // pred_region
          %s478 = sand.u32 %s34, 1
          %s479 = scalar_lea.sflag [#allocation15], %s478
          %s480 = sand.u32 %s203, 1
          %s481 = scalar_lea.vmem [#allocation14], %s480
          %483 = vsyncadd %s479, 0
          %s484 = scalar_lea.hbm %s5, %s43
          %s486 = sshll.u32 %s484, 4
          %s487 = int_to_ptr.hbm [resolvable:$true] %s486
          %s488 = sshll.u32 %s481, 4
          %s489 = int_to_ptr.vmem [resolvable:$true] %s488
          %491 = dma.hbm_to_vmem [thread:$0]  %s487, 16, %s489, %s479
        $region44: #{tpu_custom_call.1} parent=19 // pred_fallthru
          _
        // Predicated region
        $region45: #{tpu_custom_call.1} parent=19 // pred_check
          %p492 = pneg %p239
        $region46: #{tpu_custom_call.1} parent=19 // pred_check_branch
          %494 = sbr.rel (%p492) target = $region48
        $region47: #{tpu_custom_call.1} parent=19 // pred_region
          %p495 = scmp.lt.s32.totalorder %s43, 4
          %s496 = scalar_select %p495, %s43, 4
          %s497 = scalar_lea.vmem %s6, %s496
        $region48: #{tpu_custom_call.1} parent=19 // pred_fallthru
          _
        // Predicated region
        $region49: #{tpu_custom_call.1} parent=19 // pred_check
          %p498 = pneg %p267
        $region50: #{tpu_custom_call.1} parent=19 // pred_check_branch
          %500 = sbr.rel (%p498) target = $region52
        $region51: #{tpu_custom_call.1} parent=19 // pred_region
          %s501 = sand.u32 %s34, 1
          %s502 = scalar_lea.sflag [#allocation15], %s501
          %s503 = sand.u32 %s257, 1
          %s504 = smul.addr %s503, 4
          %s505 = scalar_lea.vmem [#allocation16], %s504
          %507 = vsyncadd %s502, 0
          %s508 = smul.addr %s43, 2
          %s509 = sadd.s32 %s42, %s508
          %s510 = smul.addr %s509, 4
          %s511 = scalar_lea.hbm %s7, %s510
          %s513 = sshll.u32 %s511, 4
          %s514 = int_to_ptr.hbm [resolvable:$true] %s513
          %s515 = sshll.u32 %s505, 4
          %s516 = int_to_ptr.vmem [resolvable:$true] %s515
          %518 = dma.hbm_to_vmem [thread:$0]  %s514, 64, %s516, %s502
        $region52: #{tpu_custom_call.1} parent=19 // pred_fallthru
          _
        // Predicated region
        $region53: #{tpu_custom_call.1} parent=19 // pred_check
          %p519 = pneg %p293
        $region54: #{tpu_custom_call.1} parent=19 // pred_check_branch
          %521 = sbr.rel (%p519) target = $region56
        $region55: #{tpu_custom_call.1} parent=19 // pred_region
          %s522 = sand.u32 %s283, 1
          %s523 = scalar_lea.sflag [#allocation18], %s522
          %s524 = sand.u32 %s283, 1
          %s525 = smul.addr %s524, 8
          %s526 = scalar_lea.vmem [#allocation17], %s525
          %528 = vsyncadd %s523, 0
          %s529 = smul.addr %s43, 2
          %s530 = smul.addr %s529, 4
          %s531 = scalar_lea.hbm %s8, %s530
          %s532 = sshll.u32 %s531, 4
          %s533 = int_to_ptr.hbm [resolvable:$true] %s532
          %s534 = sshll.u32 %s526, 4
          %s535 = int_to_ptr.vmem [resolvable:$true] %s534
          %540 = dma.hbm_to_vmem [thread:$0]  %s533, 128, %s535, %s523, 64, 64, 4
        $region56: #{tpu_custom_call.1} parent=19 // pred_fallthru
          _
      $region20: #{tpu_custom_call.1} parent=5 // pred_fallthru
        _
      %p541 = scmp.le.s32.totalorder 1, %s34
      %p542 = scmp.lt.s32.totalorder %s34, 21
      %p543 = pnand %p541, %p542
      %p544 = pneg %p543
      // Predicated region
      $region57: #{tpu_custom_call.1} parent=5 // pred_check
        _
      $region58: #{tpu_custom_call.1} parent=5 // pred_check_branch
        %546 = sbr.rel (%p543) target = $region60
      $region59: #{tpu_custom_call.1} parent=5 // pred_region
        %s547 = ssub.s32 %s34, 1
        %s548 = sand.u32 %s68, 1
        %s549 = scalar_lea.sflag [#allocation6], %s548
        %s550 = sand.u32 %s68, 1
        %s551 = smul.addr %s550, 8
        %s552 = scalar_lea.vmem [#allocation5], %s551
        // Predicated region
        $region61: #{tpu_custom_call.1} parent=59 // pred_check
          %p553 = pneg %p81
        $region62: #{tpu_custom_call.1} parent=59 // pred_check_branch
          %555 = sbr.rel (%p553) target = $region64
        $region63: #{tpu_custom_call.1} parent=59 // pred_region
          %557 = dma.done %s549, 128
        $region64: #{tpu_custom_call.1} parent=59 // pred_fallthru
          _
        %s558 = sand.u32 %s39, 1
        %s559 = scalar_lea.sflag [#allocation9], %s558
        %s560 = sand.u32 %s96, 1
        %s561 = smul.addr %s560, 8
        %s562 = scalar_lea.vmem [#allocation8], %s561
        // Predicated region
        $region65: #{tpu_custom_call.1} parent=59 // pred_check
          %p563 = pneg %p109
        $region66: #{tpu_custom_call.1} parent=59 // pred_check_branch
          %565 = sbr.rel (%p563) target = $region68
        $region67: #{tpu_custom_call.1} parent=59 // pred_region
          %567 = dma.done %s559, 128
        $region68: #{tpu_custom_call.1} parent=59 // pred_fallthru
          _
        %s568 = sand.u32 %s39, 1
        %s569 = scalar_lea.sflag [#allocation9], %s568
        %s570 = sand.u32 %s124, 1
        %s571 = smul.addr %s570, 8
        %s572 = scalar_lea.vmem [#allocation10], %s571
        // Predicated region
        $region69: #{tpu_custom_call.1} parent=59 // pred_check
          %p573 = pneg %p137
        $region70: #{tpu_custom_call.1} parent=59 // pred_check_branch
          %575 = sbr.rel (%p573) target = $region72
        $region71: #{tpu_custom_call.1} parent=59 // pred_region
          %577 = dma.done %s569, 128
        $region72: #{tpu_custom_call.1} parent=59 // pred_fallthru
          _
        %s578 = sand.u32 %s39, 1
        %s579 = scalar_lea.sflag [#allocation12], %s578
        %s580 = sand.u32 %s152, 1
        %s581 = smul.addr %s580, 8
        %s582 = scalar_lea.vmem [#allocation11], %s581
        // Predicated region
        $region73: #{tpu_custom_call.1} parent=59 // pred_check
          %p583 = pneg %p165
        $region74: #{tpu_custom_call.1} parent=59 // pred_check_branch
          %585 = sbr.rel (%p583) target = $region76
        $region75: #{tpu_custom_call.1} parent=59 // pred_region
          %587 = dma.done %s579, 128
        $region76: #{tpu_custom_call.1} parent=59 // pred_fallthru
          _
        %s588 = sand.u32 %s39, 1
        %s589 = scalar_lea.sflag [#allocation12], %s588
        %s590 = sand.u32 %s180, 1
        %s591 = smul.addr %s590, 8
        %s592 = scalar_lea.vmem [#allocation13], %s591
        // Predicated region
        $region77: #{tpu_custom_call.1} parent=59 // pred_check
          %p593 = pneg %p193
        $region78: #{tpu_custom_call.1} parent=59 // pred_check_branch
          %595 = sbr.rel (%p593) target = $region80
        $region79: #{tpu_custom_call.1} parent=59 // pred_region
          %597 = dma.done %s589, 128
        $region80: #{tpu_custom_call.1} parent=59 // pred_fallthru
          _
        %s598 = sand.u32 %s39, 1
        %s599 = scalar_lea.sflag [#allocation15], %s598
        %s600 = sand.u32 %s206, 1
        %s601 = scalar_lea.vmem [#allocation14], %s600
        // Predicated region
        $region81: #{tpu_custom_call.1} parent=59 // pred_check
          %p602 = pneg %p219
        $region82: #{tpu_custom_call.1} parent=59 // pred_check_branch
          %604 = sbr.rel (%p602) target = $region84
        $region83: #{tpu_custom_call.1} parent=59 // pred_region
          %606 = dma.done %s599, 16
        $region84: #{tpu_custom_call.1} parent=59 // pred_fallthru
          _
        %s607 = sand.u32 %s39, 1
        %s608 = scalar_lea.sflag [#allocation15], %s607
        %s609 = sand.u32 %s260, 1
        %s610 = smul.addr %s609, 4
        %s611 = scalar_lea.vmem [#allocation16], %s610
        // Predicated region
        $region85: #{tpu_custom_call.1} parent=59 // pred_check
          %p612 = pneg %p273
        $region86: #{tpu_custom_call.1} parent=59 // pred_check_branch
          %614 = sbr.rel (%p612) target = $region88
        $region87: #{tpu_custom_call.1} parent=59 // pred_region
          %616 = dma.done %s608, 64
        $region88: #{tpu_custom_call.1} parent=59 // pred_fallthru
          _
        %s617 = sand.u32 %s286, 1
        %s618 = scalar_lea.sflag [#allocation18], %s617
        %s619 = sand.u32 %s286, 1
        %s620 = smul.addr %s619, 8
        %s621 = scalar_lea.vmem [#allocation17], %s620
        // Predicated region
        $region89: #{tpu_custom_call.1} parent=59 // pred_check
          %p622 = pneg %p299
        $region90: #{tpu_custom_call.1} parent=59 // pred_check_branch
          %624 = sbr.rel (%p622) target = $region92
        $region91: #{tpu_custom_call.1} parent=59 // pred_region
          %626 = dma.done %s618, 128
        $region92: #{tpu_custom_call.1} parent=59 // pred_fallthru
          _
        %s627 = sand.u32 %s68, 1
        %s628 = scalar_lea.sflag [#allocation6], %s627
        %s629 = sand.u32 %s68, 1
        %s630 = smul.addr %s629, 8
        %s631 = scalar_lea.vmem [#allocation5], %s630
        %p632 = pneg %p81
        %p633 = pneg %p78
        %s634 = sand.u32 %s39, 1
        %s635 = scalar_lea.sflag [#allocation9], %s634
        %s636 = sand.u32 %s96, 1
        %s637 = smul.addr %s636, 8
        %s638 = scalar_lea.vmem [#allocation8], %s637
        %p639 = pneg %p109
        %p640 = pneg %p106
        %s641 = sand.u32 %s39, 1
        %s642 = scalar_lea.sflag [#allocation9], %s641
        %s643 = sand.u32 %s124, 1
        %s644 = smul.addr %s643, 8
        %s645 = scalar_lea.vmem [#allocation10], %s644
        %p646 = pneg %p137
        %p647 = pneg %p134
        %s648 = sand.u32 %s39, 1
        %s649 = scalar_lea.sflag [#allocation12], %s648
        %s650 = sand.u32 %s152, 1
        %s651 = smul.addr %s650, 8
        %s652 = scalar_lea.vmem [#allocation11], %s651
        %p653 = pneg %p165
        %p654 = pneg %p162
        %s655 = sand.u32 %s39, 1
        %s656 = scalar_lea.sflag [#allocation12], %s655
        %s657 = sand.u32 %s180, 1
        %s658 = smul.addr %s657, 8
        %s659 = scalar_lea.vmem [#allocation13], %s658
        %p660 = pneg %p193
        %p661 = pneg %p190
        %s662 = sand.u32 %s39, 1
        %s663 = scalar_lea.sflag [#allocation15], %s662
        %s664 = sand.u32 %s206, 1
        %s665 = scalar_lea.vmem [#allocation14], %s664
        %p666 = pneg %p219
        %p667 = pneg %p216
        %p668 = scmp.lt.s32.totalorder %s46, 4
        %s669 = scalar_select %p668, %s46, 4
        %s670 = scalar_lea.vmem %s6, %s669
        %p671 = pneg %p245
        %p672 = pneg %p242
        %s673 = sand.u32 %s39, 1
        %s674 = scalar_lea.sflag [#allocation15], %s673
        %s675 = sand.u32 %s260, 1
        %s676 = smul.addr %s675, 4
        %s677 = scalar_lea.vmem [#allocation16], %s676
        %p678 = pneg %p273
        %p679 = pneg %p270
        %s680 = sand.u32 %s286, 1
        %s681 = scalar_lea.sflag [#allocation18], %s680
        %s682 = sand.u32 %s286, 1
        %s683 = smul.addr %s682, 8
        %s684 = scalar_lea.vmem [#allocation17], %s683
        %p685 = pneg %p299
        %p686 = pneg %p296
        %p687 = pneg %p320
        %p688 = pneg %p317
        %p689 = pneg %p348
        %p690 = pneg %p345
        %s691 = sand.u32 %s335, 1
        %s692 = scalar_lea.sflag [#allocation7], %s691
        %s693 = sand.u32 %s335, 1
        %s694 = smul.addr %s693, 4
        %s695 = scalar_lea.vmem [#allocation19], %s694
        %p696 = scmp.lt.s32.totalorder %s46, 4
        %s697 = scalar_select %p696, %s46, 4
        %s698 = scalar_lea.vmem %s6, %s697
        %p700 = scmp.eq.s32.totalorder %s46, 0
        // Predicated region
        $region93: #{tpu_custom_call.1} parent=59 // pred_check
          %p701 = pneg %p700
        $region94: #{tpu_custom_call.1} parent=59 // pred_check_branch
          %703 = sbr.rel (%p701) target = $region96
        $region95: #{tpu_custom_call.1} parent=59 // pred_region
          %v704 = vld [vmem:[%s552] sm:$0xff]
          %vm705 = vcmask 130048
          %v706 = vsel %vm705, %v704, 0.0
          %707 = vadd.xlane.f32.xlu0 %v706
          %v708 = vpop.xlane.xlu0 %707
          %v709 = vld [vmem:[%s562] sm:$0xff]
          %v710 = vsel %vm705, %v709, 0.0
          %711 = vadd.xlane.f32.xlu0 %v710
          %v712 = vpop.xlane.xlu0 %711
          %v713 = vadd.f32 %v708, %v712
          %v714 = vld [vmem:[%s572] sm:$0xff]
          %v715 = vsel %vm705, %v714, 0.0
          %716 = vadd.xlane.f32.xlu0 %v715
          %v717 = vpop.xlane.xlu0 %716
          %v718 = vadd.f32 %v713, %v717
          %v719 = vld [vmem:[%s582] sm:$0xff]
          %v720 = vsel %vm705, %v719, 0.0
          %721 = vadd.xlane.f32.xlu0 %v720
          %v722 = vpop.xlane.xlu0 %721
          %v723 = vadd.f32 %v718, %v722
          %v724 = vld [vmem:[%s592] sm:$0xff]
          %v725 = vsel %vm705, %v724, 0.0
          %726 = vadd.xlane.f32.xlu0 %v725
          %v727 = vpop.xlane.xlu0 %726
          %v728 = vadd.f32 %v723, %v727
          %v729 = vmul.f32 %v728, 0.0125
          %v730 = vsub.f32 %v704, %v729
          %v731 = vmul.f32 %v730, %v730
          %v732 = vsel %vm705, %v731, 0.0
          %733 = vadd.xlane.f32.xlu0 %v732
          %v734 = vpop.xlane.xlu0 %733
          %v735 = vsub.f32 %v709, %v729
          %v736 = vmul.f32 %v735, %v735
          %v737 = vsel %vm705, %v736, 0.0
          %738 = vadd.xlane.f32.xlu0 %v737
          %v739 = vpop.xlane.xlu0 %738
          %v740 = vadd.f32 %v734, %v739
          %v741 = vsub.f32 %v714, %v729
          %v742 = vmul.f32 %v741, %v741
          %v743 = vsel %vm705, %v742, 0.0
          %744 = vadd.xlane.f32.xlu0 %v743
          %v745 = vpop.xlane.xlu0 %744
          %v746 = vadd.f32 %v740, %v745
          %v747 = vsub.f32 %v719, %v729
          %v748 = vmul.f32 %v747, %v747
          %v749 = vsel %vm705, %v748, 0.0
          %750 = vadd.xlane.f32.xlu0 %v749
          %v751 = vpop.xlane.xlu0 %750
          %v752 = vadd.f32 %v746, %v751
          %v753 = vsub.f32 %v724, %v729
          %v754 = vmul.f32 %v753, %v753
          %v755 = vsel %vm705, %v754, 0.0
          %756 = vadd.xlane.f32.xlu0 %v755
          %v757 = vpop.xlane.xlu0 %756
          %v758 = vadd.f32 %v752, %v757
          %v759 = vmul.f32 %v758, 0.0125
          %v760 = vadd.f32 %v759, 1e-05
          %v761 = vrsqrt.pop %v760
          %v762 = vmul.f32 %v761, %v760
          %v763 = vmul.f32 %v762, %v761
          %v764 = vmul.f32 0.5, %v763
          %v765 = vsub.f32 1.5, %v764
          %v766 = vmul.f32 %v761, %v765
          %vm767 = vweird.f32 %v760
          %vm768 = vweird.f32 %v761
          %vm769 = vmor %vm767, %vm768
          %v770 = vsel %vm769, %v761, %v766
          %vm771 = vcmask 7168
          %772 = vst.msk [vmem:[#allocation2] sm:$0xff] %vm771, %v729
          %773 = vst.msk [vmem:[#allocation3] sm:$0xff] %vm771, %v770
          %v774 = vmul.f32 %v730, %v770
          %v775 = vld [vmem:[%s601] sm:$0x1]
          %v777 = vperm.slane %v775, 0
          %v779 = vmul.f32 %v774, %v777
          %v780 = vld [vmem:[%s698] sm:$0x1]
          %v782 = vperm.slane %v780, 0
          %v784 = vadd.f32 %v779, %v782
          %v785 = vld [vmem:[%s611] sm:$0xf]
          %v786 = vunpack.c.l.bf16 %v785
          %v787 = vadd.f32 %v784, %v786
          %v788 = vpack.c.bf16 %v787, %v787
          %v789 = vld [vmem:[%s621] sm:$0xf]
          %v790 = vld [vmem:[%s621 + $0x4] sm:$0xf]
          %v793 = vunpack.c.l.b16 %v789
          %v794 = vunpack.c.l.b16 %v790
          %v795 = vpack.c.b16 %v794, %v793
          %v798 = vsel %vm705, %v788, 0
          %800 = vmatpush.bf16.msra.mxu0 0
          %801 = vmatpush.bf16.msra.mxu0 0
          %802 = vmatpush.bf16.msra.mxu0 0
          %803 = vmatpush.bf16.msra.mxu0 0
          %804 = vmatpush.bf16.msra.mxu0 0
          %805 = vmatpush.bf16.msra.mxu0 0
          %806 = vmatpush.bf16.msra.mxu0 0
          %807 = vmatpush.bf16.msra.mxu0 %v795
          %808 = vmatmul.bf16.gmra.mxu0 %v798
          %v809 = vpop.f32.mrf.mxu0
          %v810 = vadd.f32 0.0, %v809
          %v811 = vpop.f32.mrf.mxu0
          %812 = vdwg.mxu0
          %vm813 = vcmask 261120
          %814 = vst.msk [vmem:[#allocation4] sm:$0xff] %vm813, %v810
        $region96: #{tpu_custom_call.1} parent=59 // pred_fallthru
          _
        %p815 = scmp.eq.s32.totalorder %s46, 1
        // Predicated region
        $region97: #{tpu_custom_call.1} parent=59 // pred_check
          %p816 = pneg %p815
        $region98: #{tpu_custom_call.1} parent=59 // pred_check_branch
          %818 = sbr.rel (%p816) target = $region100
        $region99: #{tpu_custom_call.1} parent=59 // pred_region
          %v819 = vld [vmem:[%s562] sm:$0xff]
          %v820 = vld [vmem:[#allocation2] sm:$0xff]
          %v821 = vld [vmem:[#allocation3] sm:$0xff]
          %823 = vset.pattern.permute.xlu0 0
          %824 = vperm.xlu0 %823, %v820
          %v825 = vpop.permute.xlu0 %824
          %v827 = vsub.f32 %v819, %v825
          %829 = vset.pattern.permute.xlu0 0
          %830 = vperm.xlu0 %829, %v821
          %v831 = vpop.permute.xlu0 %830
          %v833 = vmul.f32 %v827, %v831
          %v834 = vld [vmem:[%s601] sm:$0x1]
          %v836 = vperm.slane %v834, 0
          %v838 = vmul.f32 %v833, %v836
          %v839 = vld [vmem:[%s698] sm:$0x1]
          %v841 = vperm.slane %v839, 0
          %v843 = vadd.f32 %v838, %v841
          %v844 = vld [vmem:[%s611] sm:$0xf]
          %v845 = vunpack.c.l.bf16 %v844
          %v846 = vadd.f32 %v843, %v845
          %v847 = vpack.c.bf16 %v846, %v846
          %v848 = vld [vmem:[%s621] sm:$0xf]
          %v849 = vld [vmem:[%s621 + $0x4] sm:$0xf]
          %v852 = vunpack.c.l.b16 %v848
          %v853 = vunpack.c.l.b16 %v849
          %v854 = vpack.c.b16 %v853, %v852
          %vm856 = vcmask 130048
          %v858 = vsel %vm856, %v847, 0
          %860 = vmatpush.bf16.msra.mxu0 0
          %861 = vmatpush.bf16.msra.mxu0 0
          %862 = vmatpush.bf16.msra.mxu0 0
          %863 = vmatpush.bf16.msra.mxu0 0
          %864 = vmatpush.bf16.msra.mxu0 0
          %865 = vmatpush.bf16.msra.mxu0 0
          %866 = vmatpush.bf16.msra.mxu0 0
          %867 = vmatpush.bf16.msra.mxu0 %v854
          %868 = vmatmul.bf16.gmra.mxu0 %v858
          %v869 = vpop.f32.mrf.mxu0
          %v870 = vadd.f32 0.0, %v869
          %v871 = vpop.f32.mrf.mxu0
          %872 = vdwg.mxu0
          %v873 = vld [vmem:[#allocation4] sm:$0xff]
          %v874 = vadd.f32 %v873, %v870
          %vm875 = vcmask 261120
          %876 = vst.msk [vmem:[#allocation4] sm:$0xff] %vm875, %v874
        $region100: #{tpu_custom_call.1} parent=59 // pred_fallthru
          _
        %p877 = scmp.eq.s32.totalorder %s46, 2
        // Predicated region
        $region101: #{tpu_custom_call.1} parent=59 // pred_check
          %p878 = pneg %p877
        $region102: #{tpu_custom_call.1} parent=59 // pred_check_branch
          %880 = sbr.rel (%p878) target = $region104
        $region103: #{tpu_custom_call.1} parent=59 // pred_region
          %v881 = vld [vmem:[%s572] sm:$0xff]
          %v882 = vld [vmem:[#allocation2] sm:$0xff]
          %v883 = vld [vmem:[#allocation3] sm:$0xff]
          %885 = vset.pattern.permute.xlu0 0
          %886 = vperm.xlu0 %885, %v882
          %v887 = vpop.permute.xlu0 %886
          %v889 = vsub.f32 %v881, %v887
          %891 = vset.pattern.permute.xlu0 0
          %892 = vperm.xlu0 %891, %v883
          %v893 = vpop.permute.xlu0 %892
          %v895 = vmul.f32 %v889, %v893
          %v896 = vld [vmem:[%s601] sm:$0x1]
          %v898 = vperm.slane %v896, 0
          %v900 = vmul.f32 %v895, %v898
          %v901 = vld [vmem:[%s698] sm:$0x1]
          %v903 = vperm.slane %v901, 0
          %v905 = vadd.f32 %v900, %v903
          %v906 = vld [vmem:[%s611] sm:$0xf]
          %v907 = vunpack.c.l.bf16 %v906
          %v908 = vadd.f32 %v905, %v907
          %v909 = vpack.c.bf16 %v908, %v908
          %v910 = vld [vmem:[%s621] sm:$0xf]
          %v911 = vld [vmem:[%s621 + $0x4] sm:$0xf]
          %v914 = vunpack.c.l.b16 %v910
          %v915 = vunpack.c.l.b16 %v911
          %v916 = vpack.c.b16 %v915, %v914
          %vm918 = vcmask 130048
          %v920 = vsel %vm918, %v909, 0
          %922 = vmatpush.bf16.msra.mxu0 0
          %923 = vmatpush.bf16.msra.mxu0 0
          %924 = vmatpush.bf16.msra.mxu0 0
          %925 = vmatpush.bf16.msra.mxu0 0
          %926 = vmatpush.bf16.msra.mxu0 0
          %927 = vmatpush.bf16.msra.mxu0 0
          %928 = vmatpush.bf16.msra.mxu0 0
          %929 = vmatpush.bf16.msra.mxu0 %v916
          %930 = vmatmul.bf16.gmra.mxu0 %v920
          %v931 = vpop.f32.mrf.mxu0
          %v932 = vadd.f32 0.0, %v931
          %v933 = vpop.f32.mrf.mxu0
          %934 = vdwg.mxu0
          %v935 = vld [vmem:[#allocation4] sm:$0xff]
          %v936 = vadd.f32 %v935, %v932
          %vm937 = vcmask 261120
          %938 = vst.msk [vmem:[#allocation4] sm:$0xff] %vm937, %v936
        $region104: #{tpu_custom_call.1} parent=59 // pred_fallthru
          _
        %p939 = scmp.eq.s32.totalorder %s46, 3
        // Predicated region
        $region105: #{tpu_custom_call.1} parent=59 // pred_check
          %p940 = pneg %p939
        $region106: #{tpu_custom_call.1} parent=59 // pred_check_branch
          %942 = sbr.rel (%p940) target = $region108
        $region107: #{tpu_custom_call.1} parent=59 // pred_region
          %v943 = vld [vmem:[%s582] sm:$0xff]
          %v944 = vld [vmem:[#allocation2] sm:$0xff]
          %v945 = vld [vmem:[#allocation3] sm:$0xff]
          %947 = vset.pattern.permute.xlu0 0
          %948 = vperm.xlu0 %947, %v944
          %v949 = vpop.permute.xlu0 %948
          %v951 = vsub.f32 %v943, %v949
          %953 = vset.pattern.permute.xlu0 0
          %954 = vperm.xlu0 %953, %v945
          %v955 = vpop.permute.xlu0 %954
          %v957 = vmul.f32 %v951, %v955
          %v958 = vld [vmem:[%s601] sm:$0x1]
          %v960 = vperm.slane %v958, 0
          %v962 = vmul.f32 %v957, %v960
          %v963 = vld [vmem:[%s698] sm:$0x1]
          %v965 = vperm.slane %v963, 0
          %v967 = vadd.f32 %v962, %v965
          %v968 = vld [vmem:[%s611] sm:$0xf]
          %v969 = vunpack.c.l.bf16 %v968
          %v970 = vadd.f32 %v967, %v969
          %v971 = vpack.c.bf16 %v970, %v970
          %v972 = vld [vmem:[%s621] sm:$0xf]
          %v973 = vld [vmem:[%s621 + $0x4] sm:$0xf]
          %v976 = vunpack.c.l.b16 %v972
          %v977 = vunpack.c.l.b16 %v973
          %v978 = vpack.c.b16 %v977, %v976
          %vm980 = vcmask 130048
          %v982 = vsel %vm980, %v971, 0
          %984 = vmatpush.bf16.msra.mxu0 0
          %985 = vmatpush.bf16.msra.mxu0 0
          %986 = vmatpush.bf16.msra.mxu0 0
          %987 = vmatpush.bf16.msra.mxu0 0
          %988 = vmatpush.bf16.msra.mxu0 0
          %989 = vmatpush.bf16.msra.mxu0 0
          %990 = vmatpush.bf16.msra.mxu0 0
          %991 = vmatpush.bf16.msra.mxu0 %v978
          %992 = vmatmul.bf16.gmra.mxu0 %v982
          %v993 = vpop.f32.mrf.mxu0
          %v994 = vadd.f32 0.0, %v993
          %v995 = vpop.f32.mrf.mxu0
          %996 = vdwg.mxu0
          %v997 = vld [vmem:[#allocation4] sm:$0xff]
          %v998 = vadd.f32 %v997, %v994
          %vm999 = vcmask 261120
          %1000 = vst.msk [vmem:[#allocation4] sm:$0xff] %vm999, %v998
        $region108: #{tpu_custom_call.1} parent=59 // pred_fallthru
          _
        %p1001 = scmp.eq.s32.totalorder %s46, 4
        // Predicated region
        $region109: #{tpu_custom_call.1} parent=59 // pred_check
          %p1002 = pneg %p1001
        $region110: #{tpu_custom_call.1} parent=59 // pred_check_branch
          %1004 = sbr.rel (%p1002) target = $region112
        $region111: #{tpu_custom_call.1} parent=59 // pred_region
          %v1005 = vld [vmem:[%s592] sm:$0xff]
          %v1006 = vld [vmem:[#allocation2] sm:$0xff]
          %v1007 = vld [vmem:[#allocation3] sm:$0xff]
          %1009 = vset.pattern.permute.xlu0 0
          %1010 = vperm.xlu0 %1009, %v1006
          %v1011 = vpop.permute.xlu0 %1010
          %v1013 = vsub.f32 %v1005, %v1011
          %1015 = vset.pattern.permute.xlu0 0
          %1016 = vperm.xlu0 %1015, %v1007
          %v1017 = vpop.permute.xlu0 %1016
          %v1019 = vmul.f32 %v1013, %v1017
          %v1020 = vld [vmem:[%s601] sm:$0x1]
          %v1022 = vperm.slane %v1020, 0
          %v1024 = vmul.f32 %v1019, %v1022
          %v1025 = vld [vmem:[%s698] sm:$0x1]
          %v1027 = vperm.slane %v1025, 0
          %v1029 = vadd.f32 %v1024, %v1027
          %v1030 = vld [vmem:[%s611] sm:$0xf]
          %v1031 = vunpack.c.l.bf16 %v1030
          %v1032 = vadd.f32 %v1029, %v1031
          %v1033 = vpack.c.bf16 %v1032, %v1032
          %v1034 = vld [vmem:[%s621] sm:$0xf]
          %v1035 = vld [vmem:[%s621 + $0x4] sm:$0xf]
          %v1038 = vunpack.c.l.b16 %v1034
          %v1039 = vunpack.c.l.b16 %v1035
          %v1040 = vpack.c.b16 %v1039, %v1038
          %vm1042 = vcmask 130048
          %v1044 = vsel %vm1042, %v1033, 0
          %1046 = vmatpush.bf16.msra.mxu0 0
          %1047 = vmatpush.bf16.msra.mxu0 0
          %1048 = vmatpush.bf16.msra.mxu0 0
          %1049 = vmatpush.bf16.msra.mxu0 0
          %1050 = vmatpush.bf16.msra.mxu0 0
          %1051 = vmatpush.bf16.msra.mxu0 0
          %1052 = vmatpush.bf16.msra.mxu0 0
          %1053 = vmatpush.bf16.msra.mxu0 %v1040
          %1054 = vmatmul.bf16.gmra.mxu0 %v1044
          %v1055 = vpop.f32.mrf.mxu0
          %v1056 = vadd.f32 0.0, %v1055
          %v1057 = vpop.f32.mrf.mxu0
          %1058 = vdwg.mxu0
          %v1059 = vld [vmem:[#allocation4] sm:$0xff]
          %v1060 = vadd.f32 %v1059, %v1056
          %vm1061 = vcmask 261120
          %1062 = vst.msk [vmem:[#allocation4] sm:$0xff] %vm1061, %v1060
          %v1063 = vld [vmem:[#allocation4] sm:$0xff]
          %v1064 = vld [vmem:[%s9] sm:$0x1]
          %v1066 = vperm.slane %v1064, 0
          %v1068 = vadd.f32 %v1063, %v1066
          %v1069 = vmul.f32 %v1068, 0.5
          %v1070 = vmul.f32 %v1068, 0.70710677
          %v1071 = vmul.f32 %v1070, %v1070
          %v1072 = vmin.f32 16.0, %v1071
          %v1073 = vmul.f32 %v1072, 2.1237322e-06
          %v1074 = vadd.f32 %v1073, 0.00028619796
          %v1075 = vmul.f32 %v1072, %v1074
          %v1076 = vadd.f32 %v1075, 0.0036580483
          %v1077 = vmul.f32 %v1072, %v1076
          %v1078 = vadd.f32 %v1077, 0.05243302
          %v1079 = vmul.f32 %v1072, %v1078
          %v1080 = vadd.f32 %v1079, 0.18741608
          %v1081 = vmul.f32 %v1072, %v1080
          %v1082 = vadd.f32 %v1081, 1.1283791
          %v1083 = vmul.f32 %v1070, %v1082
          %v1084 = vmul.f32 %v1072, 3.8918573e-05
          %v1085 = vadd.f32 %v1084, 0.001143296
          %v1086 = vmul.f32 %v1072, %v1085
          %v1087 = vadd.f32 %v1086, 0.014752088
          %v1088 = vmul.f32 %v1072, %v1087
          %v1089 = vadd.f32 %v1088, 0.112945676
          %v1090 = vmul.f32 %v1072, %v1089
          %v1091 = vadd.f32 %v1090, 0.4994258
          %v1092 = vmul.f32 %v1072, %v1091
          %v1093 = vadd.f32 %v1092, 1.0
          %v1094 = vrcp.pop %v1093
          %v1095 = vmul.f32 %v1093, %v1094
          %v1096 = vsub.f32 1.0, %v1095
          %v1097 = vmul.f32 %v1094, %v1096
          %v1098 = vadd.f32 %v1094, %v1097
          %vm1099 = vweird.f32 %v1093
          %vm1100 = vweird.f32 %v1094
          %vm1101 = vmor %vm1099, %vm1100
          %v1102 = vsel %vm1101, %v1094, %v1098
          %v1103 = vand.u32 2147483647, %v1093
          %vm1104 = vcmp.eq.f32.partialorder %v1103, 8.507059e+37
          %v1105 = vand.u32 %v1093, 2147483648
          %v1106 = vor.u32 1.1754944e-38, %v1105
          %v1107 = vsel %vm1104, %v1106, %v1102
          %v1108 = vmul.f32 %v1083, %v1107
          %v1109 = vmin.f32 %v1108, 1.0
          %v1110 = vmax.f32 %v1109, -1.0
          %v1111 = vadd.f32 %v1110, 1.0
          %v1112 = vmul.f32 %v1069, %v1111
          %v1113 = vpack.c.bf16 %v1112, %v1112
          %vm1114 = vcmask 257024
          %1115 = vst.msk [vmem:[%s695] sm:$0xf] %vm1114, %v1113
        $region112: #{tpu_custom_call.1} parent=59 // pred_fallthru
          _
        %s1116 = sand.u32 %s335, 1
        %s1117 = scalar_lea.sflag [#allocation7], %s1116
        %s1118 = sand.u32 %s335, 1
        %s1119 = smul.addr %s1118, 4
        %s1120 = scalar_lea.vmem [#allocation19], %s1119
        // Predicated region
        $region113: #{tpu_custom_call.1} parent=59 // pred_check
          %p1121 = pneg %p345
        $region114: #{tpu_custom_call.1} parent=59 // pred_check_branch
          %1123 = sbr.rel (%p1121) target = $region116
        $region115: #{tpu_custom_call.1} parent=59 // pred_region
          %1125 = vsyncadd %s1117, 0
          %s1126 = smul.addr %s44, 2
          %s1127 = sadd.s32 %s45, %s1126
          %s1128 = smul.addr %s1127, 4
          %s1129 = scalar_lea.hbm %s10, %s1128
          %s1131 = sshll.u32 %s1120, 4
          %s1132 = int_to_ptr.vmem [resolvable:$true] %s1131
          %s1133 = sshll.u32 %s1129, 4
          %s1134 = int_to_ptr.hbm [resolvable:$true] %s1133
          %1136 = dma.vmem_to_hbm [thread:$0]  %s1132, 64, %s1134, %s1117
        $region116: #{tpu_custom_call.1} parent=59 // pred_fallthru
          _
      $region60: #{tpu_custom_call.1} parent=5 // pred_fallthru
        _
      %p1137 = scmp.le.s32.totalorder 2, %s34
      // Predicated region
      $region117: #{tpu_custom_call.1} parent=5 // pred_check
        %p1138 = pneg %p1137
      $region118: #{tpu_custom_call.1} parent=5 // pred_check_branch
        %1140 = sbr.rel (%p1138) target = $region120
      $region119: #{tpu_custom_call.1} parent=5 // pred_region
        %s1141 = ssub.s32 %s34, 2
        // Predicated region
        $region121: #{tpu_custom_call.1} parent=119 // pred_check
          %p1142 = pneg %p351
        $region122: #{tpu_custom_call.1} parent=119 // pred_check_branch
          %1144 = sbr.rel (%p1142) target = $region124
        $region123: #{tpu_custom_call.1} parent=119 // pred_region
          %s1145 = sand.u32 %s336, 1
          %s1146 = scalar_lea.sflag [#allocation7], %s1145
          %s1147 = sand.u32 %s336, 1
          %s1148 = smul.addr %s1147, 4
          %s1149 = scalar_lea.vmem [#allocation19], %s1148
          %1151 = dma.done %s1146, 64
        $region124: #{tpu_custom_call.1} parent=119 // pred_fallthru
          _
      $region120: #{tpu_custom_call.1} parent=5 // pred_fallthru
        _
    $region6: #{tpu_custom_call.1} parent=1 // loop_footer
      %s38 = sadd.s32 1, %s34
    $region7: #{tpu_custom_call.1} parent=1 // loop_footer_branch
      %33 = sbr.rel target = $region3
    $region8: #{tpu_custom_call.1} parent=1 // loop_exit
      _
    %1152 = vsyncpa [#allocation6], 1
    %s1153 = scalar_lea.sflag [#allocation6], 1
    %1154 = vsyncpa %s1153, 1
    %1155 = vsyncpa [#allocation9], 1
    %s1156 = scalar_lea.sflag [#allocation9], 1
    %1157 = vsyncpa %s1156, 1
    %1158 = vsyncpa [#allocation12], 1
    %s1159 = scalar_lea.sflag [#allocation12], 1
    %1160 = vsyncpa %s1159, 1
    %1161 = vsyncpa [#allocation15], 1
    %s1162 = scalar_lea.sflag [#allocation15], 1
    %1163 = vsyncpa %s1162, 1
    %1164 = vsyncpa [#allocation18], 1
    %s1165 = scalar_lea.sflag [#allocation18], 1
    %1166 = vsyncpa %s1165, 1
    %1167 = vsyncpa [#allocation7], 1
    %s1168 = scalar_lea.sflag [#allocation7], 1
    %1169 = vsyncpa %s1168, 1

</llo_original>
